<compile_context>
chip_gen: v5e
topology: v5e:2x2
jax: 0.10.0
libtpu: 0.0.40
codegen_flags: <defaults>
</compile_context>

<pallas_src>
import functools

import jax
import jax.numpy as jnp
from jax.experimental import pallas as pl
from jax.experimental.pallas import tpu as pltpu


# ---------------------------------------------------------------------------
# In-kernel math helpers (trace-time only)
# ---------------------------------------------------------------------------
def _softplus(x):
    # numerically stable softplus == F.softplus (max/exp/log only)
    return jnp.maximum(x, 0.0) + jnp.log(1.0 + jnp.exp(-jnp.abs(x)))


def _dot(a, b):
    # bf16 MXU operands, f32 accumulation
    return jnp.dot(a, b, preferred_element_type=jnp.float32)


# ---------------------------------------------------------------------------
# Fused kernel: per-batch grid step computes LOCAL + GLOBAL + PRIOR partials
# and accumulates the weighted loss into a resident (1,1) output.
# ---------------------------------------------------------------------------
def _dim_kernel(m_ref, mp_ref, mf_ref, mpf_ref, yr_ref, ycol_ref, pr_ref,
                lw1m_ref, lw1y_ref, lb1_ref, lw2_ref, lb2_ref, lw3_ref, lb3_ref,
                gw1y_ref, gw1m_ref, gb1_ref, gw2_ref, gb2_ref, gw3_ref, gb3_ref,
                pw1_ref, pb1_ref, pw2_ref, pb2_ref, pw3_ref, pb3_ref,
                out_ref, *, alpha, beta, gamma, n_batch, n_pix):
    b = pl.program_id(0)

    @pl.when(b == 0)
    def _init():
        out_ref[...] = jnp.zeros_like(out_ref)

    # ----- LOCAL: per-pixel 1x1-conv discriminator, transposed (pixels on lanes).
    # yc is the y-dependent part of layer 1, broadcast over H*W pixels for free.
    y_col = ycol_ref[0]                                          # [y_dim, 1] bf16
    yc = _dot(lw1y_ref[...], y_col) + lb1_ref[...]               # [h, 1] f32

    def local_scores(m_blk):                                     # m_blk [C, HW] bf16
        h1 = jnp.maximum(_dot(lw1m_ref[...], m_blk) + yc, 0.0).astype(jnp.bfloat16)
        h2 = jnp.maximum(_dot(lw2_ref[...], h1) + lb2_ref[...], 0.0)   # [h, HW] f32
        # final [h,1] layer as VPU mul + sublane reduce; scores are lane-dense
        return jnp.sum(h2 * lw3_ref[...], axis=0, keepdims=True) + lb3_ref[...]  # [1, HW]

    s_m = local_scores(m_ref[0])                                 # scores for M rows
    s_mp = local_scores(mp_ref[0])                               # scores for M' rows
    local_c = (jnp.sum(_softplus(s_mp), axis=1, keepdims=True)
               + jnp.sum(_softplus(-s_m), axis=1, keepdims=True)
               ) * (beta / (n_batch * n_pix))                    # (1,1)

    # ----- GLOBAL: MLP over cat(y, flatten(M)), row form, per batch element.
    y_row = yr_ref[0]                                            # [1, y_dim] bf16
    gy = _dot(y_row, gw1y_ref[...]) + gb1_ref[...]               # [1, h] f32

    def global_score(m_flat):                                    # [1, C*HW] bf16
        g1 = jnp.maximum(_dot(m_flat, gw1m_ref[...]) + gy, 0.0).astype(jnp.bfloat16)
        g2 = jnp.maximum(_dot(g1, gw2_ref[...]) + gb2_ref[...], 0.0)
        return jnp.sum(g2 * gw3_ref[...], axis=1, keepdims=True) + gb3_ref[...]  # (1,1)

    s_gm = global_score(mf_ref[0])
    s_gmp = global_score(mpf_ref[0])
    global_c = (_softplus(s_gmp) + _softplus(-s_gm)) * (alpha / n_batch)

    # ----- PRIOR: MLP + sigmoid over y; log(sigmoid)/log(1-sigmoid) via softplus.
    def prior_score(x_row):                                      # [1, y_dim] bf16
        p1 = jnp.maximum(_dot(x_row, pw1_ref[...]) + pb1_ref[...], 0.0).astype(jnp.bfloat16)
        p2 = jnp.maximum(_dot(p1, pw2_ref[...]) + pb2_ref[...], 0.0)
        return jnp.sum(p2 * pw3_ref[...], axis=1, keepdims=True) + pb3_ref[...]  # (1,1)

    s_pr = prior_score(pr_ref[0])                                # prior sample row
    s_py = prior_score(y_row)                                    # real y row
    prior_c = (_softplus(-s_pr) + _softplus(s_py)) * (gamma / n_batch)

    out_ref[...] += local_c + global_c + prior_c


# ---------------------------------------------------------------------------
# Parameter initialization (deterministic, PyTorch-Linear-like uniform init).
# Matmul weights stored bf16 in kernel-ready layouts (local pre-transposed to
# column form, first layers pre-split), biases / final VPU layers f32.
# ---------------------------------------------------------------------------
def init_params(key, C, y_dim, H, W, hidden=128):
    def linear(k, din, dout):
        k1, k2 = jax.random.split(k)
        s = 1.0 / jnp.sqrt(jnp.float32(din))
        w = jax.random.uniform(k1, (din, dout), jnp.float32, -s, s)
        b = jax.random.uniform(k2, (dout,), jnp.float32, -s, s)
        return w, b

    ks = jax.random.split(key, 9)

    # local_d: 1x1-conv net over cat(M, y_exp); w1 split into M / y parts, transposed
    lw1, lb1 = linear(ks[0], C + y_dim, hidden)
    lw2, lb2 = linear(ks[1], hidden, hidden)
    lw3, lb3 = linear(ks[2], hidden, 1)
    local_p = (lw1[:C].T.astype(jnp.bfloat16),          # [h, C]
               lw1[C:].T.astype(jnp.bfloat16),          # [h, y_dim]
               lb1.reshape(hidden, 1),                  # [h, 1] f32
               lw2.T.astype(jnp.bfloat16),              # [h, h]
               lb2.reshape(hidden, 1),                  # [h, 1] f32
               lw3,                                     # [h, 1] f32 (VPU layer)
               lb3.reshape(1, 1))                       # [1, 1] f32

    # global_d: MLP over cat(y, flatten(M)); w1 split into y / M parts (row form)
    gw1, gb1 = linear(ks[3], y_dim + C * H * W, hidden)
    gw2, gb2 = linear(ks[4], hidden, hidden)
    gw3, gb3 = linear(ks[5], hidden, 1)
    global_p = (gw1[:y_dim].astype(jnp.bfloat16),       # [y_dim, h]
                gw1[y_dim:].astype(jnp.bfloat16),       # [C*H*W, h]
                gb1.reshape(1, hidden),                 # [1, h] f32
                gw2.astype(jnp.bfloat16),               # [h, h]
                gb2.reshape(1, hidden),                 # [1, h] f32
                gw3.T,                                  # [1, h] f32 (VPU layer)
                gb3.reshape(1, 1))

    # prior_d: MLP + sigmoid over y (row form)
    pw1, pb1 = linear(ks[6], y_dim, hidden)
    pw2, pb2 = linear(ks[7], hidden, hidden)
    pw3, pb3 = linear(ks[8], hidden, 1)
    prior_p = (pw1.astype(jnp.bfloat16), pb1.reshape(1, hidden),
               pw2.astype(jnp.bfloat16), pb2.reshape(1, hidden),
               pw3.T, pb3.reshape(1, 1))

    return {"local": local_p, "global": global_p, "prior": prior_p}


# ---------------------------------------------------------------------------
# Forward pass == DeepInfoMaxLoss.forward(y, M, M_prime)
# ---------------------------------------------------------------------------
def deep_infomax_loss(y, M, M_prime, params, prior_key,
                      alpha=0.5, beta=1.0, gamma=0.1):
    B, C, H, W = M.shape
    HW = H * W
    y_dim = y.shape[1]

    # Only dtype casts and free reshapes on the host (no transpose / concat of M).
    Mb = M.astype(jnp.bfloat16)
    Mpb = M_prime.astype(jnp.bfloat16)
    yb = y.astype(jnp.bfloat16)

    m3 = Mb.reshape(B, C, HW)            # local view:  per-batch [C, HW]
    mp3 = Mpb.reshape(B, C, HW)
    mf3 = Mb.reshape(B, 1, C * HW)       # global view: per-batch flattened row
    mpf3 = Mpb.reshape(B, 1, C * HW)
    yr3 = yb.reshape(B, 1, y_dim)        # y as rows (global / prior)
    yc3 = yb.reshape(B, y_dim, 1)        # y as columns (local)

    # TODO(synk): torch.rand_like uses the PyTorch global RNG stream; we draw the
    # prior sample from the JAX PRNG (same uniform[0,1) distribution).
    prior = jax.random.uniform(prior_key, (B, y_dim), jnp.float32)
    pr3 = prior.astype(jnp.bfloat16).reshape(B, 1, y_dim)

    data = (m3, mp3, mf3, mpf3, yr3, yc3, pr3)
    weights = (*params["local"], *params["global"], *params["prior"])

    def batch_spec(x):
        nd = x.ndim
        return pl.BlockSpec((1,) + x.shape[1:], lambda b, _n=nd: (b,) + (0,) * (_n - 1))

    def resident_spec(x):
        nd = x.ndim
        return pl.BlockSpec(x.shape, lambda b, _n=nd: (0,) * _n)

    in_specs = [batch_spec(x) for x in data] + [resident_spec(w) for w in weights]

    hid = params["local"][0].shape[0]
    flops = int(4 * B * HW * (C * hid + hid * hid + hid)
                + 4 * B * (C * HW * hid + hid * hid + hid)
                + 8 * B * (y_dim * hid + hid * hid + hid))
    transcendentals = int(4 * B * HW + 8 * B)
    bytes_accessed = int(sum(a.size * a.dtype.itemsize for a in data + weights) + 4)

    kernel = functools.partial(_dim_kernel,
                               alpha=float(alpha), beta=float(beta),
                               gamma=float(gamma), n_batch=B, n_pix=HW)

    out = pl.pallas_call(
        kernel,
        out_shape=jax.ShapeDtypeStruct((1, 1), jnp.float32),
        grid=(B,),
        in_specs=in_specs,
        out_specs=pl.BlockSpec((1, 1), lambda b: (0, 0)),
        compiler_params=pltpu.CompilerParams(
            # sequential batch axis: the (1,1) output accumulates across steps
            dimension_semantics=("arbitrary",),
            # sized so the resident bf16 global weight + double-buffered per-batch
            # blocks fit within v7x's 64 MiB physical VMEM (plenty on v5e/v6e).
            vmem_limit_bytes=48 * 1024 * 1024),
        cost_estimate=pl.CostEstimate(flops=flops,
                                      transcendentals=transcendentals,
                                      bytes_accessed=bytes_accessed),
    )(*data, *weights)
    return out[0, 0]


if __name__ == "__main__":
    key = jax.random.PRNGKey(0)
    k_y, k_M, k_Mp, k_params, k_prior = jax.random.split(key, 5)

    B, C, H, W, y_dim = 2, 4, 8, 8, 32
    y = jax.random.normal(k_y, (B, y_dim), jnp.float32)
    M = jax.random.normal(k_M, (B, C, H, W), jnp.float32)
    M_prime = jax.random.normal(k_Mp, (B, C, H, W), jnp.float32)

    params = init_params(k_params, C, y_dim, H, W)

    loss = deep_infomax_loss(y, M, M_prime, params, k_prior)
    loss = jax.block_until_ready(loss)
    assert loss.shape == () and bool(jnp.isfinite(loss))
    print("KERNEL_OK")
</pallas_src>

<mosaic_0001>
module attributes {stable_mosaic.version = 11 : i64} {
  func.func @_dim_kernel(%arg0: i32, %arg1: memref<1x4x64xbf16, #tpu.memory_space<vmem>>, %arg2: memref<1x4x64xbf16, #tpu.memory_space<vmem>>, %arg3: memref<1x1x256xbf16, #tpu.memory_space<vmem>>, %arg4: memref<1x1x256xbf16, #tpu.memory_space<vmem>>, %arg5: memref<1x1x32xbf16, #tpu.memory_space<vmem>>, %arg6: memref<1x32x1xbf16, #tpu.memory_space<vmem>>, %arg7: memref<1x1x32xbf16, #tpu.memory_space<vmem>>, %arg8: memref<128x4xbf16, #tpu.memory_space<vmem>>, %arg9: memref<128x32xbf16, #tpu.memory_space<vmem>>, %arg10: memref<128x1xf32, #tpu.memory_space<vmem>>, %arg11: memref<128x128xbf16, #tpu.memory_space<vmem>>, %arg12: memref<128x1xf32, #tpu.memory_space<vmem>>, %arg13: memref<128x1xf32, #tpu.memory_space<vmem>>, %arg14: memref<1x1xf32, #tpu.memory_space<vmem>>, %arg15: memref<32x128xbf16, #tpu.memory_space<vmem>>, %arg16: memref<256x128xbf16, #tpu.memory_space<vmem>>, %arg17: memref<1x128xf32, #tpu.memory_space<vmem>>, %arg18: memref<128x128xbf16, #tpu.memory_space<vmem>>, %arg19: memref<1x128xf32, #tpu.memory_space<vmem>>, %arg20: memref<1x128xf32, #tpu.memory_space<vmem>>, %arg21: memref<1x1xf32, #tpu.memory_space<vmem>>, %arg22: memref<32x128xbf16, #tpu.memory_space<vmem>>, %arg23: memref<1x128xf32, #tpu.memory_space<vmem>>, %arg24: memref<128x128xbf16, #tpu.memory_space<vmem>>, %arg25: memref<1x128xf32, #tpu.memory_space<vmem>>, %arg26: memref<1x128xf32, #tpu.memory_space<vmem>>, %arg27: memref<1x1xf32, #tpu.memory_space<vmem>>, %arg28: memref<1x1xf32, #tpu.memory_space<vmem>>) attributes {dimension_semantics = [#tpu.dimension_semantics<arbitrary>], iteration_bounds = array<i64: 2>, scalar_prefetch = 0 : i64, scratch_operands = 0 : i64, tpu.core_type = #tpu.core_type<tc>, window_params = [{transform_indices = @transform_0, window_bounds = array<i64: 1, 4, 64>}, {transform_indices = @transform_1, window_bounds = array<i64: 1, 4, 64>}, {transform_indices = @transform_2, window_bounds = array<i64: 1, 1, 256>}, {transform_indices = @transform_3, window_bounds = array<i64: 1, 1, 256>}, {transform_indices = @transform_4, window_bounds = array<i64: 1, 1, 32>}, {transform_indices = @transform_5, window_bounds = array<i64: 1, 32, 1>}, {transform_indices = @transform_6, window_bounds = array<i64: 1, 1, 32>}, {pipeline_mode = #tpu.pipeline_mode<synchronous>, transform_indices = @transform_7, window_bounds = array<i64: 128, 4>}, {pipeline_mode = #tpu.pipeline_mode<synchronous>, transform_indices = @transform_8, window_bounds = array<i64: 128, 32>}, {pipeline_mode = #tpu.pipeline_mode<synchronous>, transform_indices = @transform_9, window_bounds = array<i64: 128, 1>}, {pipeline_mode = #tpu.pipeline_mode<synchronous>, transform_indices = @transform_10, window_bounds = array<i64: 128, 128>}, {pipeline_mode = #tpu.pipeline_mode<synchronous>, transform_indices = @transform_11, window_bounds = array<i64: 128, 1>}, {pipeline_mode = #tpu.pipeline_mode<synchronous>, transform_indices = @transform_12, window_bounds = array<i64: 128, 1>}, {pipeline_mode = #tpu.pipeline_mode<synchronous>, transform_indices = @transform_13, window_bounds = array<i64: 1, 1>}, {pipeline_mode = #tpu.pipeline_mode<synchronous>, transform_indices = @transform_14, window_bounds = array<i64: 32, 128>}, {pipeline_mode = #tpu.pipeline_mode<synchronous>, transform_indices = @transform_15, window_bounds = array<i64: 256, 128>}, {pipeline_mode = #tpu.pipeline_mode<synchronous>, transform_indices = @transform_16, window_bounds = array<i64: 1, 128>}, {pipeline_mode = #tpu.pipeline_mode<synchronous>, transform_indices = @transform_17, window_bounds = array<i64: 128, 128>}, {pipeline_mode = #tpu.pipeline_mode<synchronous>, transform_indices = @transform_18, window_bounds = array<i64: 1, 128>}, {pipeline_mode = #tpu.pipeline_mode<synchronous>, transform_indices = @transform_19, window_bounds = array<i64: 1, 128>}, {pipeline_mode = #tpu.pipeline_mode<synchronous>, transform_indices = @transform_20, window_bounds = array<i64: 1, 1>}, {pipeline_mode = #tpu.pipeline_mode<synchronous>, transform_indices = @transform_21, window_bounds = array<i64: 32, 128>}, {pipeline_mode = #tpu.pipeline_mode<synchronous>, transform_indices = @transform_22, window_bounds = array<i64: 1, 128>}, {pipeline_mode = #tpu.pipeline_mode<synchronous>, transform_indices = @transform_23, window_bounds = array<i64: 128, 128>}, {pipeline_mode = #tpu.pipeline_mode<synchronous>, transform_indices = @transform_24, window_bounds = array<i64: 1, 128>}, {pipeline_mode = #tpu.pipeline_mode<synchronous>, transform_indices = @transform_25, window_bounds = array<i64: 1, 128>}, {pipeline_mode = #tpu.pipeline_mode<synchronous>, transform_indices = @transform_26, window_bounds = array<i64: 1, 1>}, {pipeline_mode = #tpu.pipeline_mode<synchronous>, transform_indices = @transform_27, window_bounds = array<i64: 1, 1>}]} {
    %c0_i32 = arith.constant 0 : i32
    %0 = arith.cmpi eq, %arg0, %c0_i32 : i32
    %1 = arith.extui %0 : i1 to i32
    %c0_i32_0 = arith.constant 0 : i32
    %2 = arith.cmpi ne, %1, %c0_i32_0 : i32
    scf.if %2 {
      %cst_154 = arith.constant 0.000000e+00 : f32
      %227 = vector.broadcast %cst_154 : f32 to vector<1x1xf32>
      %c0_155 = arith.constant 0 : index
      %c0_156 = arith.constant 0 : index
      %228 = vector.load %arg28[%c0_155, %c0_156] : memref<1x1xf32, #tpu.memory_space<vmem>>, vector<1x1xf32>
      tpu.vector_store %arg28[%c0_155, %c0_156], %227 {strides = array<i32>} : memref<1x1xf32, #tpu.memory_space<vmem>>, vector<1x1xf32>,
    } else {
    }
    %c0 = arith.constant 0 : index
    %c0_1 = arith.constant 0 : index
    %c0_2 = arith.constant 0 : index
    %3 = vector.load %arg6[%c0, %c0_1, %c0_2] : memref<1x32x1xbf16, #tpu.memory_space<vmem>>, vector<1x32x1xbf16>
    %4 = vector.shape_cast %3 : vector<1x32x1xbf16> to vector<32x1xbf16>
    %c0_3 = arith.constant 0 : index
    %c0_4 = arith.constant 0 : index
    %5 = vector.load %arg9[%c0_3, %c0_4] : memref<128x32xbf16, #tpu.memory_space<vmem>>, vector<128x32xbf16>
    %cst = arith.constant dense<0.000000e+00> : vector<128x1xf32>
    %6 = tpu.matmul %5, %4, %cst {dimension_numbers = #tpu.dot_dimension_numbers<[1], [0], [0], [1], [0, 0, 1, 1], [], []>} : vector<128x32xbf16>, vector<32x1xbf16>, vector<128x1xf32> -> vector<128x1xf32>
    %c0_5 = arith.constant 0 : index
    %c0_6 = arith.constant 0 : index
    %7 = vector.load %arg10[%c0_5, %c0_6] : memref<128x1xf32, #tpu.memory_space<vmem>>, vector<128x1xf32>
    %8 = arith.addf %6, %7 : vector<128x1xf32>
    %c0_7 = arith.constant 0 : index
    %c0_8 = arith.constant 0 : index
    %c0_9 = arith.constant 0 : index
    %9 = vector.load %arg1[%c0_7, %c0_8, %c0_9] : memref<1x4x64xbf16, #tpu.memory_space<vmem>>, vector<1x4x64xbf16>
    %10 = vector.shape_cast %9 : vector<1x4x64xbf16> to vector<4x64xbf16>
    %c0_10 = arith.constant 0 : index
    %c0_11 = arith.constant 0 : index
    %11 = vector.load %arg8[%c0_10, %c0_11] : memref<128x4xbf16, #tpu.memory_space<vmem>>, vector<128x4xbf16>
    %cst_12 = arith.constant dense<0.000000e+00> : vector<128x64xf32>
    %12 = tpu.matmul %11, %10, %cst_12 {dimension_numbers = #tpu.dot_dimension_numbers<[1], [0], [0], [1], [0, 0, 1, 1], [], []>} : vector<128x4xbf16>, vector<4x64xbf16>, vector<128x64xf32> -> vector<128x64xf32>
    %13 = vector.broadcast %8 : vector<128x1xf32> to vector<128x64xf32>
    %14 = arith.addf %12, %13 : vector<128x64xf32>
    %cst_13 = arith.constant 0.000000e+00 : f32
    %15 = vector.broadcast %cst_13 : f32 to vector<128x64xf32>
    %16 = arith.maximumf %14, %15 : vector<128x64xf32>
    %17 = arith.truncf %16 : vector<128x64xf32> to vector<128x64xbf16>
    %c0_14 = arith.constant 0 : index
    %c0_15 = arith.constant 0 : index
    %18 = vector.load %arg11[%c0_14, %c0_15] : memref<128x128xbf16, #tpu.memory_space<vmem>>, vector<128x128xbf16>
    %cst_16 = arith.constant dense<0.000000e+00> : vector<128x64xf32>
    %19 = tpu.matmul %18, %17, %cst_16 {dimension_numbers = #tpu.dot_dimension_numbers<[1], [0], [0], [1], [0, 0, 1, 1], [], []>} : vector<128x128xbf16>, vector<128x64xbf16>, vector<128x64xf32> -> vector<128x64xf32>
    %c0_17 = arith.constant 0 : index
    %c0_18 = arith.constant 0 : index
    %20 = vector.load %arg12[%c0_17, %c0_18] : memref<128x1xf32, #tpu.memory_space<vmem>>, vector<128x1xf32>
    %21 = vector.broadcast %20 : vector<128x1xf32> to vector<128x64xf32>
    %22 = arith.addf %19, %21 : vector<128x64xf32>
    %cst_19 = arith.constant 0.000000e+00 : f32
    %23 = vector.broadcast %cst_19 : f32 to vector<128x64xf32>
    %24 = arith.maximumf %22, %23 : vector<128x64xf32>
    %c0_20 = arith.constant 0 : index
    %c0_21 = arith.constant 0 : index
    %25 = vector.load %arg13[%c0_20, %c0_21] : memref<128x1xf32, #tpu.memory_space<vmem>>, vector<128x1xf32>
    %26 = vector.broadcast %25 : vector<128x1xf32> to vector<128x64xf32>
    %27 = arith.mulf %24, %26 : vector<128x64xf32>
    %cst_22 = arith.constant dense<0.000000e+00> : vector<64xf32>
    %28 = vector.multi_reduction <add>, %27, %cst_22 [0] : vector<128x64xf32> to vector<64xf32>
    %29 = vector.shape_cast %28 : vector<64xf32> to vector<1x64xf32>
    %c0_23 = arith.constant 0 : index
    %c0_24 = arith.constant 0 : index
    %30 = vector.load %arg14[%c0_23, %c0_24] : memref<1x1xf32, #tpu.memory_space<vmem>>, vector<1x1xf32>
    %31 = vector.broadcast %30 : vector<1x1xf32> to vector<1x64xf32>
    %32 = arith.addf %29, %31 : vector<1x64xf32>
    %c0_25 = arith.constant 0 : index
    %c0_26 = arith.constant 0 : index
    %c0_27 = arith.constant 0 : index
    %33 = vector.load %arg2[%c0_25, %c0_26, %c0_27] : memref<1x4x64xbf16, #tpu.memory_space<vmem>>, vector<1x4x64xbf16>
    %34 = vector.shape_cast %33 : vector<1x4x64xbf16> to vector<4x64xbf16>
    %c0_28 = arith.constant 0 : index
    %c0_29 = arith.constant 0 : index
    %35 = vector.load %arg8[%c0_28, %c0_29] : memref<128x4xbf16, #tpu.memory_space<vmem>>, vector<128x4xbf16>
    %cst_30 = arith.constant dense<0.000000e+00> : vector<128x64xf32>
    %36 = tpu.matmul %35, %34, %cst_30 {dimension_numbers = #tpu.dot_dimension_numbers<[1], [0], [0], [1], [0, 0, 1, 1], [], []>} : vector<128x4xbf16>, vector<4x64xbf16>, vector<128x64xf32> -> vector<128x64xf32>
    %37 = vector.broadcast %8 : vector<128x1xf32> to vector<128x64xf32>
    %38 = arith.addf %36, %37 : vector<128x64xf32>
    %cst_31 = arith.constant 0.000000e+00 : f32
    %39 = vector.broadcast %cst_31 : f32 to vector<128x64xf32>
    %40 = arith.maximumf %38, %39 : vector<128x64xf32>
    %41 = arith.truncf %40 : vector<128x64xf32> to vector<128x64xbf16>
    %c0_32 = arith.constant 0 : index
    %c0_33 = arith.constant 0 : index
    %42 = vector.load %arg11[%c0_32, %c0_33] : memref<128x128xbf16, #tpu.memory_space<vmem>>, vector<128x128xbf16>
    %cst_34 = arith.constant dense<0.000000e+00> : vector<128x64xf32>
    %43 = tpu.matmul %42, %41, %cst_34 {dimension_numbers = #tpu.dot_dimension_numbers<[1], [0], [0], [1], [0, 0, 1, 1], [], []>} : vector<128x128xbf16>, vector<128x64xbf16>, vector<128x64xf32> -> vector<128x64xf32>
    %c0_35 = arith.constant 0 : index
    %c0_36 = arith.constant 0 : index
    %44 = vector.load %arg12[%c0_35, %c0_36] : memref<128x1xf32, #tpu.memory_space<vmem>>, vector<128x1xf32>
    %45 = vector.broadcast %44 : vector<128x1xf32> to vector<128x64xf32>
    %46 = arith.addf %43, %45 : vector<128x64xf32>
    %cst_37 = arith.constant 0.000000e+00 : f32
    %47 = vector.broadcast %cst_37 : f32 to vector<128x64xf32>
    %48 = arith.maximumf %46, %47 : vector<128x64xf32>
    %c0_38 = arith.constant 0 : index
    %c0_39 = arith.constant 0 : index
    %49 = vector.load %arg13[%c0_38, %c0_39] : memref<128x1xf32, #tpu.memory_space<vmem>>, vector<128x1xf32>
    %50 = vector.broadcast %49 : vector<128x1xf32> to vector<128x64xf32>
    %51 = arith.mulf %48, %50 : vector<128x64xf32>
    %cst_40 = arith.constant dense<0.000000e+00> : vector<64xf32>
    %52 = vector.multi_reduction <add>, %51, %cst_40 [0] : vector<128x64xf32> to vector<64xf32>
    %53 = vector.shape_cast %52 : vector<64xf32> to vector<1x64xf32>
    %c0_41 = arith.constant 0 : index
    %c0_42 = arith.constant 0 : index
    %54 = vector.load %arg14[%c0_41, %c0_42] : memref<1x1xf32, #tpu.memory_space<vmem>>, vector<1x1xf32>
    %55 = vector.broadcast %54 : vector<1x1xf32> to vector<1x64xf32>
    %56 = arith.addf %53, %55 : vector<1x64xf32>
    %cst_43 = arith.constant 0.000000e+00 : f32
    %57 = vector.broadcast %cst_43 : f32 to vector<1x64xf32>
    %58 = arith.maximumf %56, %57 : vector<1x64xf32>
    %59 = math.absf %56 : vector<1x64xf32>
    %cst_44 = arith.constant 0.000000e+00 : f32
    %60 = vector.broadcast %cst_44 : f32 to vector<1x64xf32>
    %61 = arith.subf %60, %59 : vector<1x64xf32>
    %62 = math.exp %61 : vector<1x64xf32>
    %cst_45 = arith.constant 1.000000e+00 : f32
    %63 = vector.broadcast %cst_45 : f32 to vector<1x64xf32>
    %64 = arith.addf %63, %62 : vector<1x64xf32>
    %65 = math.log %64 : vector<1x64xf32>
    %66 = arith.addf %58, %65 : vector<1x64xf32>
    %cst_46 = arith.constant dense<0.000000e+00> : vector<1xf32>
    %67 = vector.multi_reduction <add>, %66, %cst_46 [1] : vector<1x64xf32> to vector<1xf32>
    %68 = vector.shape_cast %67 : vector<1xf32> to vector<1x1xf32>
    %cst_47 = arith.constant 0.000000e+00 : f32
    %69 = vector.broadcast %cst_47 : f32 to vector<1x64xf32>
    %70 = arith.subf %69, %32 : vector<1x64xf32>
    %cst_48 = arith.constant 0.000000e+00 : f32
    %71 = vector.broadcast %cst_48 : f32 to vector<1x64xf32>
    %72 = arith.maximumf %70, %71 : vector<1x64xf32>
    %73 = math.absf %70 : vector<1x64xf32>
    %cst_49 = arith.constant 0.000000e+00 : f32
    %74 = vector.broadcast %cst_49 : f32 to vector<1x64xf32>
    %75 = arith.subf %74, %73 : vector<1x64xf32>
    %76 = math.exp %75 : vector<1x64xf32>
    %cst_50 = arith.constant 1.000000e+00 : f32
    %77 = vector.broadcast %cst_50 : f32 to vector<1x64xf32>
    %78 = arith.addf %77, %76 : vector<1x64xf32>
    %79 = math.log %78 : vector<1x64xf32>
    %80 = arith.addf %72, %79 : vector<1x64xf32>
    %cst_51 = arith.constant dense<0.000000e+00> : vector<1xf32>
    %81 = vector.multi_reduction <add>, %80, %cst_51 [1] : vector<1x64xf32> to vector<1xf32>
    %82 = vector.shape_cast %81 : vector<1xf32> to vector<1x1xf32>
    %83 = arith.addf %68, %82 : vector<1x1xf32>
    %cst_52 = arith.constant 7.812500e-03 : f32
    %84 = vector.broadcast %cst_52 : f32 to vector<1x1xf32>
    %85 = arith.mulf %83, %84 : vector<1x1xf32>
    %c0_53 = arith.constant 0 : index
    %c0_54 = arith.constant 0 : index
    %c0_55 = arith.constant 0 : index
    %86 = vector.load %arg5[%c0_53, %c0_54, %c0_55] : memref<1x1x32xbf16, #tpu.memory_space<vmem>>, vector<1x1x32xbf16>
    %87 = vector.shape_cast %86 : vector<1x1x32xbf16> to vector<1x32xbf16>
    %c0_56 = arith.constant 0 : index
    %c0_57 = arith.constant 0 : index
    %88 = vector.load %arg15[%c0_56, %c0_57] : memref<32x128xbf16, #tpu.memory_space<vmem>>, vector<32x128xbf16>
    %cst_58 = arith.constant dense<0.000000e+00> : vector<1x128xf32>
    %89 = tpu.matmul %87, %88, %cst_58 {dimension_numbers = #tpu.dot_dimension_numbers<[1], [0], [0], [1], [0, 0, 1, 1], [], []>} : vector<1x32xbf16>, vector<32x128xbf16>, vector<1x128xf32> -> vector<1x128xf32>
    %c0_59 = arith.constant 0 : index
    %c0_60 = arith.constant 0 : index
    %90 = vector.load %arg17[%c0_59, %c0_60] : memref<1x128xf32, #tpu.memory_space<vmem>>, vector<1x128xf32>
    %91 = arith.addf %89, %90 : vector<1x128xf32>
    %c0_61 = arith.constant 0 : index
    %c0_62 = arith.constant 0 : index
    %c0_63 = arith.constant 0 : index
    %92 = vector.load %arg3[%c0_61, %c0_62, %c0_63] : memref<1x1x256xbf16, #tpu.memory_space<vmem>>, vector<1x1x256xbf16>
    %93 = vector.shape_cast %92 : vector<1x1x256xbf16> to vector<1x256xbf16>
    %c0_64 = arith.constant 0 : index
    %c0_65 = arith.constant 0 : index
    %94 = vector.load %arg16[%c0_64, %c0_65] : memref<256x128xbf16, #tpu.memory_space<vmem>>, vector<256x128xbf16>
    %cst_66 = arith.constant dense<0.000000e+00> : vector<1x128xf32>
    %95 = tpu.matmul %93, %94, %cst_66 {dimension_numbers = #tpu.dot_dimension_numbers<[1], [0], [0], [1], [0, 0, 1, 1], [], []>} : vector<1x256xbf16>, vector<256x128xbf16>, vector<1x128xf32> -> vector<1x128xf32>
    %96 = arith.addf %95, %91 : vector<1x128xf32>
    %cst_67 = arith.constant 0.000000e+00 : f32
    %97 = vector.broadcast %cst_67 : f32 to vector<1x128xf32>
    %98 = arith.maximumf %96, %97 : vector<1x128xf32>
    %99 = arith.truncf %98 : vector<1x128xf32> to vector<1x128xbf16>
    %c0_68 = arith.constant 0 : index
    %c0_69 = arith.constant 0 : index
    %100 = vector.load %arg18[%c0_68, %c0_69] : memref<128x128xbf16, #tpu.memory_space<vmem>>, vector<128x128xbf16>
    %cst_70 = arith.constant dense<0.000000e+00> : vector<1x128xf32>
    %101 = tpu.matmul %99, %100, %cst_70 {dimension_numbers = #tpu.dot_dimension_numbers<[1], [0], [0], [1], [0, 0, 1, 1], [], []>} : vector<1x128xbf16>, vector<128x128xbf16>, vector<1x128xf32> -> vector<1x128xf32>
    %c0_71 = arith.constant 0 : index
    %c0_72 = arith.constant 0 : index
    %102 = vector.load %arg19[%c0_71, %c0_72] : memref<1x128xf32, #tpu.memory_space<vmem>>, vector<1x128xf32>
    %103 = arith.addf %101, %102 : vector<1x128xf32>
    %cst_73 = arith.constant 0.000000e+00 : f32
    %104 = vector.broadcast %cst_73 : f32 to vector<1x128xf32>
    %105 = arith.maximumf %103, %104 : vector<1x128xf32>
    %c0_74 = arith.constant 0 : index
    %c0_75 = arith.constant 0 : index
    %106 = vector.load %arg20[%c0_74, %c0_75] : memref<1x128xf32, #tpu.memory_space<vmem>>, vector<1x128xf32>
    %107 = arith.mulf %105, %106 : vector<1x128xf32>
    %cst_76 = arith.constant dense<0.000000e+00> : vector<1xf32>
    %108 = vector.multi_reduction <add>, %107, %cst_76 [1] : vector<1x128xf32> to vector<1xf32>
    %109 = vector.shape_cast %108 : vector<1xf32> to vector<1x1xf32>
    %c0_77 = arith.constant 0 : index
    %c0_78 = arith.constant 0 : index
    %110 = vector.load %arg21[%c0_77, %c0_78] : memref<1x1xf32, #tpu.memory_space<vmem>>, vector<1x1xf32>
    %111 = arith.addf %109, %110 : vector<1x1xf32>
    %c0_79 = arith.constant 0 : index
    %c0_80 = arith.constant 0 : index
    %c0_81 = arith.constant 0 : index
    %112 = vector.load %arg4[%c0_79, %c0_80, %c0_81] : memref<1x1x256xbf16, #tpu.memory_space<vmem>>, vector<1x1x256xbf16>
    %113 = vector.shape_cast %112 : vector<1x1x256xbf16> to vector<1x256xbf16>
    %c0_82 = arith.constant 0 : index
    %c0_83 = arith.constant 0 : index
    %114 = vector.load %arg16[%c0_82, %c0_83] : memref<256x128xbf16, #tpu.memory_space<vmem>>, vector<256x128xbf16>
    %cst_84 = arith.constant dense<0.000000e+00> : vector<1x128xf32>
    %115 = tpu.matmul %113, %114, %cst_84 {dimension_numbers = #tpu.dot_dimension_numbers<[1], [0], [0], [1], [0, 0, 1, 1], [], []>} : vector<1x256xbf16>, vector<256x128xbf16>, vector<1x128xf32> -> vector<1x128xf32>
    %116 = arith.addf %115, %91 : vector<1x128xf32>
    %cst_85 = arith.constant 0.000000e+00 : f32
    %117 = vector.broadcast %cst_85 : f32 to vector<1x128xf32>
    %118 = arith.maximumf %116, %117 : vector<1x128xf32>
    %119 = arith.truncf %118 : vector<1x128xf32> to vector<1x128xbf16>
    %c0_86 = arith.constant 0 : index
    %c0_87 = arith.constant 0 : index
    %120 = vector.load %arg18[%c0_86, %c0_87] : memref<128x128xbf16, #tpu.memory_space<vmem>>, vector<128x128xbf16>
    %cst_88 = arith.constant dense<0.000000e+00> : vector<1x128xf32>
    %121 = tpu.matmul %119, %120, %cst_88 {dimension_numbers = #tpu.dot_dimension_numbers<[1], [0], [0], [1], [0, 0, 1, 1], [], []>} : vector<1x128xbf16>, vector<128x128xbf16>, vector<1x128xf32> -> vector<1x128xf32>
    %c0_89 = arith.constant 0 : index
    %c0_90 = arith.constant 0 : index
    %122 = vector.load %arg19[%c0_89, %c0_90] : memref<1x128xf32, #tpu.memory_space<vmem>>, vector<1x128xf32>
    %123 = arith.addf %121, %122 : vector<1x128xf32>
    %cst_91 = arith.constant 0.000000e+00 : f32
    %124 = vector.broadcast %cst_91 : f32 to vector<1x128xf32>
    %125 = arith.maximumf %123, %124 : vector<1x128xf32>
    %c0_92 = arith.constant 0 : index
    %c0_93 = arith.constant 0 : index
    %126 = vector.load %arg20[%c0_92, %c0_93] : memref<1x128xf32, #tpu.memory_space<vmem>>, vector<1x128xf32>
    %127 = arith.mulf %125, %126 : vector<1x128xf32>
    %cst_94 = arith.constant dense<0.000000e+00> : vector<1xf32>
    %128 = vector.multi_reduction <add>, %127, %cst_94 [1] : vector<1x128xf32> to vector<1xf32>
    %129 = vector.shape_cast %128 : vector<1xf32> to vector<1x1xf32>
    %c0_95 = arith.constant 0 : index
    %c0_96 = arith.constant 0 : index
    %130 = vector.load %arg21[%c0_95, %c0_96] : memref<1x1xf32, #tpu.memory_space<vmem>>, vector<1x1xf32>
    %131 = arith.addf %129, %130 : vector<1x1xf32>
    %cst_97 = arith.constant 0.000000e+00 : f32
    %132 = vector.broadcast %cst_97 : f32 to vector<1x1xf32>
    %133 = arith.maximumf %131, %132 : vector<1x1xf32>
    %134 = math.absf %131 : vector<1x1xf32>
    %cst_98 = arith.constant 0.000000e+00 : f32
    %135 = vector.broadcast %cst_98 : f32 to vector<1x1xf32>
    %136 = arith.subf %135, %134 : vector<1x1xf32>
    %137 = math.exp %136 : vector<1x1xf32>
    %cst_99 = arith.constant 1.000000e+00 : f32
    %138 = vector.broadcast %cst_99 : f32 to vector<1x1xf32>
    %139 = arith.addf %138, %137 : vector<1x1xf32>
    %140 = math.log %139 : vector<1x1xf32>
    %141 = arith.addf %133, %140 : vector<1x1xf32>
    %cst_100 = arith.constant 0.000000e+00 : f32
    %142 = vector.broadcast %cst_100 : f32 to vector<1x1xf32>
    %143 = arith.subf %142, %111 : vector<1x1xf32>
    %cst_101 = arith.constant 0.000000e+00 : f32
    %144 = vector.broadcast %cst_101 : f32 to vector<1x1xf32>
    %145 = arith.maximumf %143, %144 : vector<1x1xf32>
    %146 = math.absf %143 : vector<1x1xf32>
    %cst_102 = arith.constant 0.000000e+00 : f32
    %147 = vector.broadcast %cst_102 : f32 to vector<1x1xf32>
    %148 = arith.subf %147, %146 : vector<1x1xf32>
    %149 = math.exp %148 : vector<1x1xf32>
    %cst_103 = arith.constant 1.000000e+00 : f32
    %150 = vector.broadcast %cst_103 : f32 to vector<1x1xf32>
    %151 = arith.addf %150, %149 : vector<1x1xf32>
    %152 = math.log %151 : vector<1x1xf32>
    %153 = arith.addf %145, %152 : vector<1x1xf32>
    %154 = arith.addf %141, %153 : vector<1x1xf32>
    %cst_104 = arith.constant 2.500000e-01 : f32
    %155 = vector.broadcast %cst_104 : f32 to vector<1x1xf32>
    %156 = arith.mulf %154, %155 : vector<1x1xf32>
    %c0_105 = arith.constant 0 : index
    %c0_106 = arith.constant 0 : index
    %c0_107 = arith.constant 0 : index
    %157 = vector.load %arg7[%c0_105, %c0_106, %c0_107] : memref<1x1x32xbf16, #tpu.memory_space<vmem>>, vector<1x1x32xbf16>
    %158 = vector.shape_cast %157 : vector<1x1x32xbf16> to vector<1x32xbf16>
    %c0_108 = arith.constant 0 : index
    %c0_109 = arith.constant 0 : index
    %159 = vector.load %arg22[%c0_108, %c0_109] : memref<32x128xbf16, #tpu.memory_space<vmem>>, vector<32x128xbf16>
    %cst_110 = arith.constant dense<0.000000e+00> : vector<1x128xf32>
    %160 = tpu.matmul %158, %159, %cst_110 {dimension_numbers = #tpu.dot_dimension_numbers<[1], [0], [0], [1], [0, 0, 1, 1], [], []>} : vector<1x32xbf16>, vector<32x128xbf16>, vector<1x128xf32> -> vector<1x128xf32>
    %c0_111 = arith.constant 0 : index
    %c0_112 = arith.constant 0 : index
    %161 = vector.load %arg23[%c0_111, %c0_112] : memref<1x128xf32, #tpu.memory_space<vmem>>, vector<1x128xf32>
    %162 = arith.addf %160, %161 : vector<1x128xf32>
    %cst_113 = arith.constant 0.000000e+00 : f32
    %163 = vector.broadcast %cst_113 : f32 to vector<1x128xf32>
    %164 = arith.maximumf %162, %163 : vector<1x128xf32>
    %165 = arith.truncf %164 : vector<1x128xf32> to vector<1x128xbf16>
    %c0_114 = arith.constant 0 : index
    %c0_115 = arith.constant 0 : index
    %166 = vector.load %arg24[%c0_114, %c0_115] : memref<128x128xbf16, #tpu.memory_space<vmem>>, vector<128x128xbf16>
    %cst_116 = arith.constant dense<0.000000e+00> : vector<1x128xf32>
    %167 = tpu.matmul %165, %166, %cst_116 {dimension_numbers = #tpu.dot_dimension_numbers<[1], [0], [0], [1], [0, 0, 1, 1], [], []>} : vector<1x128xbf16>, vector<128x128xbf16>, vector<1x128xf32> -> vector<1x128xf32>
    %c0_117 = arith.constant 0 : index
    %c0_118 = arith.constant 0 : index
    %168 = vector.load %arg25[%c0_117, %c0_118] : memref<1x128xf32, #tpu.memory_space<vmem>>, vector<1x128xf32>
    %169 = arith.addf %167, %168 : vector<1x128xf32>
    %cst_119 = arith.constant 0.000000e+00 : f32
    %170 = vector.broadcast %cst_119 : f32 to vector<1x128xf32>
    %171 = arith.maximumf %169, %170 : vector<1x128xf32>
    %c0_120 = arith.constant 0 : index
    %c0_121 = arith.constant 0 : index
    %172 = vector.load %arg26[%c0_120, %c0_121] : memref<1x128xf32, #tpu.memory_space<vmem>>, vector<1x128xf32>
    %173 = arith.mulf %171, %172 : vector<1x128xf32>
    %cst_122 = arith.constant dense<0.000000e+00> : vector<1xf32>
    %174 = vector.multi_reduction <add>, %173, %cst_122 [1] : vector<1x128xf32> to vector<1xf32>
    %175 = vector.shape_cast %174 : vector<1xf32> to vector<1x1xf32>
    %c0_123 = arith.constant 0 : index
    %c0_124 = arith.constant 0 : index
    %176 = vector.load %arg27[%c0_123, %c0_124] : memref<1x1xf32, #tpu.memory_space<vmem>>, vector<1x1xf32>
    %177 = arith.addf %175, %176 : vector<1x1xf32>
    %c0_125 = arith.constant 0 : index
    %c0_126 = arith.constant 0 : index
    %178 = vector.load %arg22[%c0_125, %c0_126] : memref<32x128xbf16, #tpu.memory_space<vmem>>, vector<32x128xbf16>
    %cst_127 = arith.constant dense<0.000000e+00> : vector<1x128xf32>
    %179 = tpu.matmul %87, %178, %cst_127 {dimension_numbers = #tpu.dot_dimension_numbers<[1], [0], [0], [1], [0, 0, 1, 1], [], []>} : vector<1x32xbf16>, vector<32x128xbf16>, vector<1x128xf32> -> vector<1x128xf32>
    %c0_128 = arith.constant 0 : index
    %c0_129 = arith.constant 0 : index
    %180 = vector.load %arg23[%c0_128, %c0_129] : memref<1x128xf32, #tpu.memory_space<vmem>>, vector<1x128xf32>
    %181 = arith.addf %179, %180 : vector<1x128xf32>
    %cst_130 = arith.constant 0.000000e+00 : f32
    %182 = vector.broadcast %cst_130 : f32 to vector<1x128xf32>
    %183 = arith.maximumf %181, %182 : vector<1x128xf32>
    %184 = arith.truncf %183 : vector<1x128xf32> to vector<1x128xbf16>
    %c0_131 = arith.constant 0 : index
    %c0_132 = arith.constant 0 : index
    %185 = vector.load %arg24[%c0_131, %c0_132] : memref<128x128xbf16, #tpu.memory_space<vmem>>, vector<128x128xbf16>
    %cst_133 = arith.constant dense<0.000000e+00> : vector<1x128xf32>
    %186 = tpu.matmul %184, %185, %cst_133 {dimension_numbers = #tpu.dot_dimension_numbers<[1], [0], [0], [1], [0, 0, 1, 1], [], []>} : vector<1x128xbf16>, vector<128x128xbf16>, vector<1x128xf32> -> vector<1x128xf32>
    %c0_134 = arith.constant 0 : index
    %c0_135 = arith.constant 0 : index
    %187 = vector.load %arg25[%c0_134, %c0_135] : memref<1x128xf32, #tpu.memory_space<vmem>>, vector<1x128xf32>
    %188 = arith.addf %186, %187 : vector<1x128xf32>
    %cst_136 = arith.constant 0.000000e+00 : f32
    %189 = vector.broadcast %cst_136 : f32 to vector<1x128xf32>
    %190 = arith.maximumf %188, %189 : vector<1x128xf32>
    %c0_137 = arith.constant 0 : index
    %c0_138 = arith.constant 0 : index
    %191 = vector.load %arg26[%c0_137, %c0_138] : memref<1x128xf32, #tpu.memory_space<vmem>>, vector<1x128xf32>
    %192 = arith.mulf %190, %191 : vector<1x128xf32>
    %cst_139 = arith.constant dense<0.000000e+00> : vector<1xf32>
    %193 = vector.multi_reduction <add>, %192, %cst_139 [1] : vector<1x128xf32> to vector<1xf32>
    %194 = vector.shape_cast %193 : vector<1xf32> to vector<1x1xf32>
    %c0_140 = arith.constant 0 : index
    %c0_141 = arith.constant 0 : index
    %195 = vector.load %arg27[%c0_140, %c0_141] : memref<1x1xf32, #tpu.memory_space<vmem>>, vector<1x1xf32>
    %196 = arith.addf %194, %195 : vector<1x1xf32>
    %cst_142 = arith.constant 0.000000e+00 : f32
    %197 = vector.broadcast %cst_142 : f32 to vector<1x1xf32>
    %198 = arith.subf %197, %177 : vector<1x1xf32>
    %cst_143 = arith.constant 0.000000e+00 : f32
    %199 = vector.broadcast %cst_143 : f32 to vector<1x1xf32>
    %200 = arith.maximumf %198, %199 : vector<1x1xf32>
    %201 = math.absf %198 : vector<1x1xf32>
    %cst_144 = arith.constant 0.000000e+00 : f32
    %202 = vector.broadcast %cst_144 : f32 to vector<1x1xf32>
    %203 = arith.subf %202, %201 : vector<1x1xf32>
    %204 = math.exp %203 : vector<1x1xf32>
    %cst_145 = arith.constant 1.000000e+00 : f32
    %205 = vector.broadcast %cst_145 : f32 to vector<1x1xf32>
    %206 = arith.addf %205, %204 : vector<1x1xf32>
    %207 = math.log %206 : vector<1x1xf32>
    %208 = arith.addf %200, %207 : vector<1x1xf32>
    %cst_146 = arith.constant 0.000000e+00 : f32
    %209 = vector.broadcast %cst_146 : f32 to vector<1x1xf32>
    %210 = arith.maximumf %196, %209 : vector<1x1xf32>
    %211 = math.absf %196 : vector<1x1xf32>
    %cst_147 = arith.constant 0.000000e+00 : f32
    %212 = vector.broadcast %cst_147 : f32 to vector<1x1xf32>
    %213 = arith.subf %212, %211 : vector<1x1xf32>
    %214 = math.exp %213 : vector<1x1xf32>
    %cst_148 = arith.constant 1.000000e+00 : f32
    %215 = vector.broadcast %cst_148 : f32 to vector<1x1xf32>
    %216 = arith.addf %215, %214 : vector<1x1xf32>
    %217 = math.log %216 : vector<1x1xf32>
    %218 = arith.addf %210, %217 : vector<1x1xf32>
    %219 = arith.addf %208, %218 : vector<1x1xf32>
    %cst_149 = arith.constant 5.000000e-02 : f32
    %220 = vector.broadcast %cst_149 : f32 to vector<1x1xf32>
    %221 = arith.mulf %219, %220 : vector<1x1xf32>
    %c0_150 = arith.constant 0 : index
    %c0_151 = arith.constant 0 : index
    %222 = vector.load %arg28[%c0_150, %c0_151] : memref<1x1xf32, #tpu.memory_space<vmem>>, vector<1x1xf32>
    %223 = arith.addf %85, %156 : vector<1x1xf32>
    %224 = arith.addf %223, %221 : vector<1x1xf32>
    %225 = arith.addf %222, %224 : vector<1x1xf32>
    %c0_152 = arith.constant 0 : index
    %c0_153 = arith.constant 0 : index
    %226 = vector.load %arg28[%c0_152, %c0_153] : memref<1x1xf32, #tpu.memory_space<vmem>>, vector<1x1xf32>
    tpu.vector_store %arg28[%c0_152, %c0_153], %225 {strides = array<i32>} : memref<1x1xf32, #tpu.memory_space<vmem>>, vector<1x1xf32>,
    return
  }
  func.func @transform_0(%arg0: i32) -> (i32, i32, i32) {
    %c0_i32 = arith.constant 0 : i32
    %c0_i32_0 = arith.constant 0 : i32
    %c0_i32_1 = arith.constant 0 : i32
    return %arg0, %c0_i32, %c0_i32_0 : i32, i32, i32
  }
  func.func @transform_1(%arg0: i32) -> (i32, i32, i32) {
    %c0_i32 = arith.constant 0 : i32
    %c0_i32_0 = arith.constant 0 : i32
    %c0_i32_1 = arith.constant 0 : i32
    return %arg0, %c0_i32, %c0_i32_0 : i32, i32, i32
  }
  func.func @transform_2(%arg0: i32) -> (i32, i32, i32) {
    %c0_i32 = arith.constant 0 : i32
    %c0_i32_0 = arith.constant 0 : i32
    %c0_i32_1 = arith.constant 0 : i32
    return %arg0, %c0_i32, %c0_i32_0 : i32, i32, i32
  }
  func.func @transform_3(%arg0: i32) -> (i32, i32, i32) {
    %c0_i32 = arith.constant 0 : i32
    %c0_i32_0 = arith.constant 0 : i32
    %c0_i32_1 = arith.constant 0 : i32
    return %arg0, %c0_i32, %c0_i32_0 : i32, i32, i32
  }
  func.func @transform_4(%arg0: i32) -> (i32, i32, i32) {
    %c0_i32 = arith.constant 0 : i32
    %c0_i32_0 = arith.constant 0 : i32
    %c0_i32_1 = arith.constant 0 : i32
    return %arg0, %c0_i32, %c0_i32_0 : i32, i32, i32
  }
  func.func @transform_5(%arg0: i32) -> (i32, i32, i32) {
    %c0_i32 = arith.constant 0 : i32
    %c0_i32_0 = arith.constant 0 : i32
    %c0_i32_1 = arith.constant 0 : i32
    return %arg0, %c0_i32, %c0_i32_0 : i32, i32, i32
  }
  func.func @transform_6(%arg0: i32) -> (i32, i32, i32) {
    %c0_i32 = arith.constant 0 : i32
    %c0_i32_0 = arith.constant 0 : i32
    %c0_i32_1 = arith.constant 0 : i32
    return %arg0, %c0_i32, %c0_i32_0 : i32, i32, i32
  }
  func.func @transform_7(%arg0: i32) -> (i32, i32) {
    %c0_i32 = arith.constant 0 : i32
    %c0_i32_0 = arith.constant 0 : i32
    %c0_i32_1 = arith.constant 0 : i32
    return %c0_i32, %c0_i32_0 : i32, i32
  }
  func.func @transform_8(%arg0: i32) -> (i32, i32) {
    %c0_i32 = arith.constant 0 : i32
    %c0_i32_0 = arith.constant 0 : i32
    %c0_i32_1 = arith.constant 0 : i32
    return %c0_i32, %c0_i32_0 : i32, i32
  }
  func.func @transform_9(%arg0: i32) -> (i32, i32) {
    %c0_i32 = arith.constant 0 : i32
    %c0_i32_0 = arith.constant 0 : i32
    %c0_i32_1 = arith.constant 0 : i32
    return %c0_i32, %c0_i32_0 : i32, i32
  }
  func.func @transform_10(%arg0: i32) -> (i32, i32) {
    %c0_i32 = arith.constant 0 : i32
    %c0_i32_0 = arith.constant 0 : i32
    %c0_i32_1 = arith.constant 0 : i32
    return %c0_i32, %c0_i32_0 : i32, i32
  }
  func.func @transform_11(%arg0: i32) -> (i32, i32) {
    %c0_i32 = arith.constant 0 : i32
    %c0_i32_0 = arith.constant 0 : i32
    %c0_i32_1 = arith.constant 0 : i32
    return %c0_i32, %c0_i32_0 : i32, i32
  }
  func.func @transform_12(%arg0: i32) -> (i32, i32) {
    %c0_i32 = arith.constant 0 : i32
    %c0_i32_0 = arith.constant 0 : i32
    %c0_i32_1 = arith.constant 0 : i32
    return %c0_i32, %c0_i32_0 : i32, i32
  }
  func.func @transform_13(%arg0: i32) -> (i32, i32) {
    %c0_i32 = arith.constant 0 : i32
    %c0_i32_0 = arith.constant 0 : i32
    %c0_i32_1 = arith.constant 0 : i32
    return %c0_i32, %c0_i32_0 : i32, i32
  }
  func.func @transform_14(%arg0: i32) -> (i32, i32) {
    %c0_i32 = arith.constant 0 : i32
    %c0_i32_0 = arith.constant 0 : i32
    %c0_i32_1 = arith.constant 0 : i32
    return %c0_i32, %c0_i32_0 : i32, i32
  }
  func.func @transform_15(%arg0: i32) -> (i32, i32) {
    %c0_i32 = arith.constant 0 : i32
    %c0_i32_0 = arith.constant 0 : i32
    %c0_i32_1 = arith.constant 0 : i32
    return %c0_i32, %c0_i32_0 : i32, i32
  }
  func.func @transform_16(%arg0: i32) -> (i32, i32) {
    %c0_i32 = arith.constant 0 : i32
    %c0_i32_0 = arith.constant 0 : i32
    %c0_i32_1 = arith.constant 0 : i32
    return %c0_i32, %c0_i32_0 : i32, i32
  }
  func.func @transform_17(%arg0: i32) -> (i32, i32) {
    %c0_i32 = arith.constant 0 : i32
    %c0_i32_0 = arith.constant 0 : i32
    %c0_i32_1 = arith.constant 0 : i32
    return %c0_i32, %c0_i32_0 : i32, i32
  }
  func.func @transform_18(%arg0: i32) -> (i32, i32) {
    %c0_i32 = arith.constant 0 : i32
    %c0_i32_0 = arith.constant 0 : i32
    %c0_i32_1 = arith.constant 0 : i32
    return %c0_i32, %c0_i32_0 : i32, i32
  }
  func.func @transform_19(%arg0: i32) -> (i32, i32) {
    %c0_i32 = arith.constant 0 : i32
    %c0_i32_0 = arith.constant 0 : i32
    %c0_i32_1 = arith.constant 0 : i32
    return %c0_i32, %c0_i32_0 : i32, i32
  }
  func.func @transform_20(%arg0: i32) -> (i32, i32) {
    %c0_i32 = arith.constant 0 : i32
    %c0_i32_0 = arith.constant 0 : i32
    %c0_i32_1 = arith.constant 0 : i32
    return %c0_i32, %c0_i32_0 : i32, i32
  }
  func.func @transform_21(%arg0: i32) -> (i32, i32) {
    %c0_i32 = arith.constant 0 : i32
    %c0_i32_0 = arith.constant 0 : i32
    %c0_i32_1 = arith.constant 0 : i32
    return %c0_i32, %c0_i32_0 : i32, i32
  }
  func.func @transform_22(%arg0: i32) -> (i32, i32) {
    %c0_i32 = arith.constant 0 : i32
    %c0_i32_0 = arith.constant 0 : i32
    %c0_i32_1 = arith.constant 0 : i32
    return %c0_i32, %c0_i32_0 : i32, i32
  }
  func.func @transform_23(%arg0: i32) -> (i32, i32) {
    %c0_i32 = arith.constant 0 : i32
    %c0_i32_0 = arith.constant 0 : i32
    %c0_i32_1 = arith.constant 0 : i32
    return %c0_i32, %c0_i32_0 : i32, i32
  }
  func.func @transform_24(%arg0: i32) -> (i32, i32) {
    %c0_i32 = arith.constant 0 : i32
    %c0_i32_0 = arith.constant 0 : i32
    %c0_i32_1 = arith.constant 0 : i32
    return %c0_i32, %c0_i32_0 : i32, i32
  }
  func.func @transform_25(%arg0: i32) -> (i32, i32) {
    %c0_i32 = arith.constant 0 : i32
    %c0_i32_0 = arith.constant 0 : i32
    %c0_i32_1 = arith.constant 0 : i32
    return %c0_i32, %c0_i32_0 : i32, i32
  }
  func.func @transform_26(%arg0: i32) -> (i32, i32) {
    %c0_i32 = arith.constant 0 : i32
    %c0_i32_0 = arith.constant 0 : i32
    %c0_i32_1 = arith.constant 0 : i32
    return %c0_i32, %c0_i32_0 : i32, i32
  }
  func.func @transform_27(%arg0: i32) -> (i32, i32) {
    %c0_i32 = arith.constant 0 : i32
    %c0_i32_0 = arith.constant 0 : i32
    %c0_i32_1 = arith.constant 0 : i32
    return %c0_i32, %c0_i32_0 : i32, i32
  }
}

</mosaic_0001>

<llo_original>
// kernel: tpu_custom_call.1
$region0: #{tpu_custom_call.1}
  #allocation0 [shape = 'u32[]', space=smem, size = 0x4, offset = 0x4, fixed_abs, tag = 'smem constant byte address 0x4 - core index']
  #allocation1 [shape = 'u32[72,128]{1,0:T(1,128)}', space=vmem, size = 0x9000, scoped, tag = 'internal scratch']
  #allocation2 [shape = 'f32[1,1]{1,0:T(1,128)S(1)}', space=vmem, size = 0x200, scoped, tag = 'scoped memory for tpu_custom_call.1']
  #allocation3 [shape = 'f32[1,1]{1,0:T(1,128)S(1)}', space=vmem, size = 0x200, scoped, tag = 'scoped memory for tpu_custom_call.1']
  #allocation4 [shape = 'f32[1,1]{1,0:T(1,128)S(1)}', space=vmem, size = 0x200, scoped, tag = 'scoped memory for tpu_custom_call.1']
  %s0 = inlined_call_operand.vmem [shape: bf16[2,4,64], index: 0, kind: input, shape index: {}]
  %s1 = inlined_call_operand.vmem [shape: bf16[2,4,64], index: 1, kind: input, shape index: {}]
  %s2 = inlined_call_operand.vmem [shape: bf16[2,1,256], index: 2, kind: input, shape index: {}]
  %s3 = inlined_call_operand.vmem [shape: bf16[2,1,256], index: 3, kind: input, shape index: {}]
  %s4 = inlined_call_operand.vmem [shape: bf16[2,1,32], index: 4, kind: input, shape index: {}]
  %s5 = inlined_call_operand.vmem [shape: bf16[2,32,1], index: 5, kind: input, shape index: {}]
  %s6 = inlined_call_operand.vmem [shape: bf16[2,1,32], index: 6, kind: input, shape index: {}]
  %s7 = inlined_call_operand.vmem [shape: bf16[128,4], index: 7, kind: input, shape index: {}]
  %s8 = inlined_call_operand.vmem [shape: bf16[128,32], index: 8, kind: input, shape index: {}]
  %s9 = inlined_call_operand.vmem [shape: f32[128,1], index: 9, kind: input, shape index: {}]
  %s10 = inlined_call_operand.vmem [shape: bf16[128,128], index: 10, kind: input, shape index: {}]
  %s11 = inlined_call_operand.vmem [shape: f32[128,1], index: 11, kind: input, shape index: {}]
  %s12 = inlined_call_operand.vmem [shape: f32[128,1], index: 12, kind: input, shape index: {}]
  %s13 = inlined_call_operand.<no memory space> [shape: f32[1,1], index: 13, kind: input, shape index: {}]
  %s14 = inlined_call_operand.vmem [shape: bf16[32,128], index: 14, kind: input, shape index: {}]
  %s15 = inlined_call_operand.vmem [shape: bf16[256,128], index: 15, kind: input, shape index: {}]
  %s16 = inlined_call_operand.vmem [shape: f32[1,128], index: 16, kind: input, shape index: {}]
  %s17 = inlined_call_operand.vmem [shape: bf16[128,128], index: 17, kind: input, shape index: {}]
  %s18 = inlined_call_operand.vmem [shape: f32[1,128], index: 18, kind: input, shape index: {}]
  %s19 = inlined_call_operand.vmem [shape: f32[1,128], index: 19, kind: input, shape index: {}]
  %s20 = inlined_call_operand.<no memory space> [shape: f32[1,1], index: 20, kind: input, shape index: {}]
  %s21 = inlined_call_operand.vmem [shape: bf16[32,128], index: 21, kind: input, shape index: {}]
  %s22 = inlined_call_operand.vmem [shape: f32[1,128], index: 22, kind: input, shape index: {}]
  %s23 = inlined_call_operand.vmem [shape: bf16[128,128], index: 23, kind: input, shape index: {}]
  %s24 = inlined_call_operand.vmem [shape: f32[1,128], index: 24, kind: input, shape index: {}]
  %s25 = inlined_call_operand.vmem [shape: f32[1,128], index: 25, kind: input, shape index: {}]
  %s26 = inlined_call_operand.<no memory space> [shape: f32[1,1], index: 26, kind: input, shape index: {}]
  %s27 = inlined_call_operand.hbm [shape: f32[1,1], index: 27, kind: output, shape index: {}]
  %s28 = sld [smem:[#allocation0]]
  $region145: #{tpu_custom_call.1} parent=0
    _
  %s30 = ssub.s32 1, %s28
  %s31 = scalar_select 0, %s30, %s28
  %v32 = vstv %s13
  %33 = vst [vmem:[#allocation2] sm:$0x1] %v32
  %v34 = vstv %s20
  %35 = vst [vmem:[#allocation3] sm:$0x1] %v34
  %v36 = vstv %s26
  %37 = vst [vmem:[#allocation4] sm:$0x1] %v36
  $region1: #{tpu_custom_call.1} parent=0
    #allocation5 [shape = 'u8[512]{0}', space=vmem, size = 0x400, scoped, tag = 'output window, operand 0, single buffered']
    #allocation6 [shape = 's32[2]{0}', space=sflag, size = 0x8, scoped, tag = 'scoped memory for tpu_custom_call.1']
    %38 = vsyncpa [#allocation6], 0
    loop: start=0, step=1, limit=4
    $region2: #{tpu_custom_call.1} parent=1 // loop_pre_header
      _
    $region3: #{tpu_custom_call.1} parent=1 // loop_header
      %s40 = sphi 0, %s44
      %p41 = scmp.ge.s32.totalorder %s40, 4
      %s50 = sphi 0, %s52
      %s53 = sphi 0, %s50
      %s54 = sphi 0, %s53
      %s70 = sphi 0, %s54
      %s76 = sphi 0, %s78
      %s79 = sphi 0, %s76
      %s80 = sphi 0, %s79
      %s96 = sphi 0, %s80
      %s102 = sphi 0, %s104
      %s105 = sphi 0, %s102
      %s106 = sphi 0, %s105
      %s122 = sphi 0, %s106
      %s128 = sphi 0, %s130
      %s131 = sphi 0, %s128
      %s132 = sphi 0, %s131
      %s148 = sphi 0, %s132
      %s154 = sphi 0, %s156
      %s157 = sphi 0, %s154
      %s158 = sphi 0, %s157
      %s174 = sphi 0, %s158
      %s180 = sphi 0, %s182
      %s183 = sphi 0, %s180
      %s184 = sphi 0, %s183
      %s200 = sphi 0, %s184
      %s206 = sphi 0, %s208
      %s209 = sphi 0, %s206
      %s210 = sphi 0, %s209
      %s226 = sphi 0, %s210
      %s230 = sphi 0, %s230
      %s232 = sphi 0, %s230
      %s233 = sphi 0, %s232
      %s247 = sphi 0, %s233
      %s251 = sphi 0, %s251
      %s253 = sphi 0, %s251
      %s254 = sphi 0, %s253
      %s268 = sphi 0, %s254
      %s272 = sphi 0, %s272
      %s274 = sphi 0, %s272
      %s275 = sphi 0, %s274
      %s289 = sphi 0, %s275
      %s293 = sphi 0, %s293
      %s295 = sphi 0, %s293
      %s296 = sphi 0, %s295
      %s310 = sphi 0, %s296
      %s314 = sphi 0, %s314
      %s316 = sphi 0, %s314
      %s317 = sphi 0, %s316
      %s331 = sphi 0, %s317
      %s335 = sphi 0, %s335
      %s337 = sphi 0, %s335
      %s338 = sphi 0, %s337
      %s352 = sphi 0, %s338
      %s356 = sphi 0, %s356
      %s358 = sphi 0, %s356
      %s359 = sphi 0, %s358
      %s373 = sphi 0, %s359
      %s377 = sphi 0, %s377
      %s379 = sphi 0, %s377
      %s380 = sphi 0, %s379
      %s394 = sphi 0, %s380
      %s398 = sphi 0, %s398
      %s400 = sphi 0, %s398
      %s401 = sphi 0, %s400
      %s415 = sphi 0, %s401
      %s419 = sphi 0, %s419
      %s421 = sphi 0, %s419
      %s422 = sphi 0, %s421
      %s436 = sphi 0, %s422
      %s440 = sphi 0, %s440
      %s442 = sphi 0, %s440
      %s443 = sphi 0, %s442
      %s457 = sphi 0, %s443
      %s461 = sphi 0, %s461
      %s463 = sphi 0, %s461
      %s464 = sphi 0, %s463
      %s478 = sphi 0, %s464
      %s482 = sphi 0, %s482
      %s484 = sphi 0, %s482
      %s485 = sphi 0, %s484
      %s499 = sphi 0, %s485
      %s503 = sphi 0, %s503
      %s505 = sphi 0, %s503
      %s506 = sphi 0, %s505
      %s520 = sphi 0, %s506
      %s524 = sphi 0, %s524
      %s526 = sphi 0, %s524
      %s527 = sphi 0, %s526
      %s541 = sphi 0, %s527
      %s545 = sphi 0, %s545
      %s547 = sphi 0, %s545
      %s548 = sphi 0, %s547
      %s562 = sphi 0, %s548
      %s566 = sphi 0, %s566
      %s568 = sphi 0, %s566
      %s569 = sphi 0, %s568
      %s583 = sphi 0, %s569
      %s587 = sphi 0, %s587
      %s589 = sphi 0, %s587
      %s590 = sphi 0, %s589
      %s604 = sphi 0, %s590
      %s608 = sphi 0, %s608
      %s610 = sphi 0, %s608
      %s611 = sphi 0, %s610
      %s625 = sphi 0, %s611
      %s629 = sphi 0, %s629
      %s631 = sphi 0, %s629
      %s632 = sphi 0, %s631
      %s646 = sphi 0, %s632
      %s650 = sphi 0, %s650
      %s652 = sphi 0, %s650
      %s653 = sphi 0, %s652
      %s667 = sphi 0, %s653
    $region4: #{tpu_custom_call.1} parent=1 // loop_header_branch
      %43 = sbr.rel (%p41) target = $region8
    $region5: #{tpu_custom_call.1} parent=1 // loop_body
      %s45 = ssub.s32 %s40, 1
      %s46 = ssub.s32 %s40, 2
      %s47 = sadd.s32 %s40, 1
      %s48 = ssub.s32 %s40, %s47
      %p49 = scmp.eq.s32.totalorder %s48, 0
      %s51 = sadd.s32 %s50, 1
      %s52 = scalar_select %p49, %s50, %s51
      %p55 = pneg %p49
      %p56 = scmp.eq.s32.totalorder %s40, 1
      %p57 = por %p55, %p56
      %p58 = scmp.ne.s32.totalorder %s50, %s53
      %p59 = scmp.eq.s32.totalorder %s40, 0
      %p60 = por %p58, %p59
      %p61 = scmp.ne.s32.totalorder %s50, %s53
      %p62 = scmp.eq.s32.totalorder %s45, 1
      %p63 = por %p61, %p62
      %p64 = scmp.ne.s32.totalorder %s53, %s54
      %p65 = scmp.eq.s32.totalorder %s45, 0
      %p66 = por %p64, %p65
      %p67 = scmp.ne.s32.totalorder %s53, %s54
      %p68 = scmp.eq.s32.totalorder %s46, 1
      %p69 = por %p67, %p68
      %p71 = scmp.ne.s32.totalorder %s54, %s70
      %p72 = scmp.eq.s32.totalorder %s46, 0
      %p73 = por %p71, %p72
      %s74 = ssub.s32 %s40, %s47
      %p75 = scmp.eq.s32.totalorder %s74, 0
      %s77 = sadd.s32 %s76, 1
      %s78 = scalar_select %p75, %s76, %s77
      %p81 = pneg %p75
      %p82 = scmp.eq.s32.totalorder %s40, 1
      %p83 = por %p81, %p82
      %p84 = scmp.ne.s32.totalorder %s76, %s79
      %p85 = scmp.eq.s32.totalorder %s40, 0
      %p86 = por %p84, %p85
      %p87 = scmp.ne.s32.totalorder %s76, %s79
      %p88 = scmp.eq.s32.totalorder %s45, 1
      %p89 = por %p87, %p88
      %p90 = scmp.ne.s32.totalorder %s79, %s80
      %p91 = scmp.eq.s32.totalorder %s45, 0
      %p92 = por %p90, %p91
      %p93 = scmp.ne.s32.totalorder %s79, %s80
      %p94 = scmp.eq.s32.totalorder %s46, 1
      %p95 = por %p93, %p94
      %p97 = scmp.ne.s32.totalorder %s80, %s96
      %p98 = scmp.eq.s32.totalorder %s46, 0
      %p99 = por %p97, %p98
      %s100 = ssub.s32 %s40, %s47
      %p101 = scmp.eq.s32.totalorder %s100, 0
      %s103 = sadd.s32 %s102, 1
      %s104 = scalar_select %p101, %s102, %s103
      %p107 = pneg %p101
      %p108 = scmp.eq.s32.totalorder %s40, 1
      %p109 = por %p107, %p108
      %p110 = scmp.ne.s32.totalorder %s102, %s105
      %p111 = scmp.eq.s32.totalorder %s40, 0
      %p112 = por %p110, %p111
      %p113 = scmp.ne.s32.totalorder %s102, %s105
      %p114 = scmp.eq.s32.totalorder %s45, 1
      %p115 = por %p113, %p114
      %p116 = scmp.ne.s32.totalorder %s105, %s106
      %p117 = scmp.eq.s32.totalorder %s45, 0
      %p118 = por %p116, %p117
      %p119 = scmp.ne.s32.totalorder %s105, %s106
      %p120 = scmp.eq.s32.totalorder %s46, 1
      %p121 = por %p119, %p120
      %p123 = scmp.ne.s32.totalorder %s106, %s122
      %p124 = scmp.eq.s32.totalorder %s46, 0
      %p125 = por %p123, %p124
      %s126 = ssub.s32 %s40, %s47
      %p127 = scmp.eq.s32.totalorder %s126, 0
      %s129 = sadd.s32 %s128, 1
      %s130 = scalar_select %p127, %s128, %s129
      %p133 = pneg %p127
      %p134 = scmp.eq.s32.totalorder %s40, 1
      %p135 = por %p133, %p134
      %p136 = scmp.ne.s32.totalorder %s128, %s131
      %p137 = scmp.eq.s32.totalorder %s40, 0
      %p138 = por %p136, %p137
      %p139 = scmp.ne.s32.totalorder %s128, %s131
      %p140 = scmp.eq.s32.totalorder %s45, 1
      %p141 = por %p139, %p140
      %p142 = scmp.ne.s32.totalorder %s131, %s132
      %p143 = scmp.eq.s32.totalorder %s45, 0
      %p144 = por %p142, %p143
      %p145 = scmp.ne.s32.totalorder %s131, %s132
      %p146 = scmp.eq.s32.totalorder %s46, 1
      %p147 = por %p145, %p146
      %p149 = scmp.ne.s32.totalorder %s132, %s148
      %p150 = scmp.eq.s32.totalorder %s46, 0
      %p151 = por %p149, %p150
      %s152 = ssub.s32 %s40, %s47
      %p153 = scmp.eq.s32.totalorder %s152, 0
      %s155 = sadd.s32 %s154, 1
      %s156 = scalar_select %p153, %s154, %s155
      %p159 = pneg %p153
      %p160 = scmp.eq.s32.totalorder %s40, 1
      %p161 = por %p159, %p160
      %p162 = scmp.ne.s32.totalorder %s154, %s157
      %p163 = scmp.eq.s32.totalorder %s40, 0
      %p164 = por %p162, %p163
      %p165 = scmp.ne.s32.totalorder %s154, %s157
      %p166 = scmp.eq.s32.totalorder %s45, 1
      %p167 = por %p165, %p166
      %p168 = scmp.ne.s32.totalorder %s157, %s158
      %p169 = scmp.eq.s32.totalorder %s45, 0
      %p170 = por %p168, %p169
      %p171 = scmp.ne.s32.totalorder %s157, %s158
      %p172 = scmp.eq.s32.totalorder %s46, 1
      %p173 = por %p171, %p172
      %p175 = scmp.ne.s32.totalorder %s158, %s174
      %p176 = scmp.eq.s32.totalorder %s46, 0
      %p177 = por %p175, %p176
      %s178 = ssub.s32 %s40, %s47
      %p179 = scmp.eq.s32.totalorder %s178, 0
      %s181 = sadd.s32 %s180, 1
      %s182 = scalar_select %p179, %s180, %s181
      %p185 = pneg %p179
      %p186 = scmp.eq.s32.totalorder %s40, 1
      %p187 = por %p185, %p186
      %p188 = scmp.ne.s32.totalorder %s180, %s183
      %p189 = scmp.eq.s32.totalorder %s40, 0
      %p190 = por %p188, %p189
      %p191 = scmp.ne.s32.totalorder %s180, %s183
      %p192 = scmp.eq.s32.totalorder %s45, 1
      %p193 = por %p191, %p192
      %p194 = scmp.ne.s32.totalorder %s183, %s184
      %p195 = scmp.eq.s32.totalorder %s45, 0
      %p196 = por %p194, %p195
      %p197 = scmp.ne.s32.totalorder %s183, %s184
      %p198 = scmp.eq.s32.totalorder %s46, 1
      %p199 = por %p197, %p198
      %p201 = scmp.ne.s32.totalorder %s184, %s200
      %p202 = scmp.eq.s32.totalorder %s46, 0
      %p203 = por %p201, %p202
      %s204 = ssub.s32 %s40, %s47
      %p205 = scmp.eq.s32.totalorder %s204, 0
      %s207 = sadd.s32 %s206, 1
      %s208 = scalar_select %p205, %s206, %s207
      %p211 = pneg %p205
      %p212 = scmp.eq.s32.totalorder %s40, 1
      %p213 = por %p211, %p212
      %p214 = scmp.ne.s32.totalorder %s206, %s209
      %p215 = scmp.eq.s32.totalorder %s40, 0
      %p216 = por %p214, %p215
      %p217 = scmp.ne.s32.totalorder %s206, %s209
      %p218 = scmp.eq.s32.totalorder %s45, 1
      %p219 = por %p217, %p218
      %p220 = scmp.ne.s32.totalorder %s209, %s210
      %p221 = scmp.eq.s32.totalorder %s45, 0
      %p222 = por %p220, %p221
      %p223 = scmp.ne.s32.totalorder %s209, %s210
      %p224 = scmp.eq.s32.totalorder %s46, 1
      %p225 = por %p223, %p224
      %p227 = scmp.ne.s32.totalorder %s210, %s226
      %p228 = scmp.eq.s32.totalorder %s46, 0
      %p229 = por %p227, %p228
      %s231 = sadd.s32 %s230, 1
      %p234 = scmp.eq.s32.totalorder %s40, 1
      %p235 = scmp.ne.s32.totalorder %s230, %s232
      %p236 = scmp.eq.s32.totalorder %s40, 0
      %p237 = por %p235, %p236
      %p238 = scmp.ne.s32.totalorder %s230, %s232
      %p239 = scmp.eq.s32.totalorder %s45, 1
      %p240 = por %p238, %p239
      %p241 = scmp.ne.s32.totalorder %s232, %s233
      %p242 = scmp.eq.s32.totalorder %s45, 0
      %p243 = por %p241, %p242
      %p244 = scmp.ne.s32.totalorder %s232, %s233
      %p245 = scmp.eq.s32.totalorder %s46, 1
      %p246 = por %p244, %p245
      %p248 = scmp.ne.s32.totalorder %s233, %s247
      %p249 = scmp.eq.s32.totalorder %s46, 0
      %p250 = por %p248, %p249
      %s252 = sadd.s32 %s251, 1
      %p255 = scmp.eq.s32.totalorder %s40, 1
      %p256 = scmp.ne.s32.totalorder %s251, %s253
      %p257 = scmp.eq.s32.totalorder %s40, 0
      %p258 = por %p256, %p257
      %p259 = scmp.ne.s32.totalorder %s251, %s253
      %p260 = scmp.eq.s32.totalorder %s45, 1
      %p261 = por %p259, %p260
      %p262 = scmp.ne.s32.totalorder %s253, %s254
      %p263 = scmp.eq.s32.totalorder %s45, 0
      %p264 = por %p262, %p263
      %p265 = scmp.ne.s32.totalorder %s253, %s254
      %p266 = scmp.eq.s32.totalorder %s46, 1
      %p267 = por %p265, %p266
      %p269 = scmp.ne.s32.totalorder %s254, %s268
      %p270 = scmp.eq.s32.totalorder %s46, 0
      %p271 = por %p269, %p270
      %s273 = sadd.s32 %s272, 1
      %p276 = scmp.eq.s32.totalorder %s40, 1
      %p277 = scmp.ne.s32.totalorder %s272, %s274
      %p278 = scmp.eq.s32.totalorder %s40, 0
      %p279 = por %p277, %p278
      %p280 = scmp.ne.s32.totalorder %s272, %s274
      %p281 = scmp.eq.s32.totalorder %s45, 1
      %p282 = por %p280, %p281
      %p283 = scmp.ne.s32.totalorder %s274, %s275
      %p284 = scmp.eq.s32.totalorder %s45, 0
      %p285 = por %p283, %p284
      %p286 = scmp.ne.s32.totalorder %s274, %s275
      %p287 = scmp.eq.s32.totalorder %s46, 1
      %p288 = por %p286, %p287
      %p290 = scmp.ne.s32.totalorder %s275, %s289
      %p291 = scmp.eq.s32.totalorder %s46, 0
      %p292 = por %p290, %p291
      %s294 = sadd.s32 %s293, 1
      %p297 = scmp.eq.s32.totalorder %s40, 1
      %p298 = scmp.ne.s32.totalorder %s293, %s295
      %p299 = scmp.eq.s32.totalorder %s40, 0
      %p300 = por %p298, %p299
      %p301 = scmp.ne.s32.totalorder %s293, %s295
      %p302 = scmp.eq.s32.totalorder %s45, 1
      %p303 = por %p301, %p302
      %p304 = scmp.ne.s32.totalorder %s295, %s296
      %p305 = scmp.eq.s32.totalorder %s45, 0
      %p306 = por %p304, %p305
      %p307 = scmp.ne.s32.totalorder %s295, %s296
      %p308 = scmp.eq.s32.totalorder %s46, 1
      %p309 = por %p307, %p308
      %p311 = scmp.ne.s32.totalorder %s296, %s310
      %p312 = scmp.eq.s32.totalorder %s46, 0
      %p313 = por %p311, %p312
      %s315 = sadd.s32 %s314, 1
      %p318 = scmp.eq.s32.totalorder %s40, 1
      %p319 = scmp.ne.s32.totalorder %s314, %s316
      %p320 = scmp.eq.s32.totalorder %s40, 0
      %p321 = por %p319, %p320
      %p322 = scmp.ne.s32.totalorder %s314, %s316
      %p323 = scmp.eq.s32.totalorder %s45, 1
      %p324 = por %p322, %p323
      %p325 = scmp.ne.s32.totalorder %s316, %s317
      %p326 = scmp.eq.s32.totalorder %s45, 0
      %p327 = por %p325, %p326
      %p328 = scmp.ne.s32.totalorder %s316, %s317
      %p329 = scmp.eq.s32.totalorder %s46, 1
      %p330 = por %p328, %p329
      %p332 = scmp.ne.s32.totalorder %s317, %s331
      %p333 = scmp.eq.s32.totalorder %s46, 0
      %p334 = por %p332, %p333
      %s336 = sadd.s32 %s335, 1
      %p339 = scmp.eq.s32.totalorder %s40, 1
      %p340 = scmp.ne.s32.totalorder %s335, %s337
      %p341 = scmp.eq.s32.totalorder %s40, 0
      %p342 = por %p340, %p341
      %p343 = scmp.ne.s32.totalorder %s335, %s337
      %p344 = scmp.eq.s32.totalorder %s45, 1
      %p345 = por %p343, %p344
      %p346 = scmp.ne.s32.totalorder %s337, %s338
      %p347 = scmp.eq.s32.totalorder %s45, 0
      %p348 = por %p346, %p347
      %p349 = scmp.ne.s32.totalorder %s337, %s338
      %p350 = scmp.eq.s32.totalorder %s46, 1
      %p351 = por %p349, %p350
      %p353 = scmp.ne.s32.totalorder %s338, %s352
      %p354 = scmp.eq.s32.totalorder %s46, 0
      %p355 = por %p353, %p354
      %s357 = sadd.s32 %s356, 1
      %p360 = scmp.eq.s32.totalorder %s40, 1
      %p361 = scmp.ne.s32.totalorder %s356, %s358
      %p362 = scmp.eq.s32.totalorder %s40, 0
      %p363 = por %p361, %p362
      %p364 = scmp.ne.s32.totalorder %s356, %s358
      %p365 = scmp.eq.s32.totalorder %s45, 1
      %p366 = por %p364, %p365
      %p367 = scmp.ne.s32.totalorder %s358, %s359
      %p368 = scmp.eq.s32.totalorder %s45, 0
      %p369 = por %p367, %p368
      %p370 = scmp.ne.s32.totalorder %s358, %s359
      %p371 = scmp.eq.s32.totalorder %s46, 1
      %p372 = por %p370, %p371
      %p374 = scmp.ne.s32.totalorder %s359, %s373
      %p375 = scmp.eq.s32.totalorder %s46, 0
      %p376 = por %p374, %p375
      %s378 = sadd.s32 %s377, 1
      %p381 = scmp.eq.s32.totalorder %s40, 1
      %p382 = scmp.ne.s32.totalorder %s377, %s379
      %p383 = scmp.eq.s32.totalorder %s40, 0
      %p384 = por %p382, %p383
      %p385 = scmp.ne.s32.totalorder %s377, %s379
      %p386 = scmp.eq.s32.totalorder %s45, 1
      %p387 = por %p385, %p386
      %p388 = scmp.ne.s32.totalorder %s379, %s380
      %p389 = scmp.eq.s32.totalorder %s45, 0
      %p390 = por %p388, %p389
      %p391 = scmp.ne.s32.totalorder %s379, %s380
      %p392 = scmp.eq.s32.totalorder %s46, 1
      %p393 = por %p391, %p392
      %p395 = scmp.ne.s32.totalorder %s380, %s394
      %p396 = scmp.eq.s32.totalorder %s46, 0
      %p397 = por %p395, %p396
      %s399 = sadd.s32 %s398, 1
      %p402 = scmp.eq.s32.totalorder %s40, 1
      %p403 = scmp.ne.s32.totalorder %s398, %s400
      %p404 = scmp.eq.s32.totalorder %s40, 0
      %p405 = por %p403, %p404
      %p406 = scmp.ne.s32.totalorder %s398, %s400
      %p407 = scmp.eq.s32.totalorder %s45, 1
      %p408 = por %p406, %p407
      %p409 = scmp.ne.s32.totalorder %s400, %s401
      %p410 = scmp.eq.s32.totalorder %s45, 0
      %p411 = por %p409, %p410
      %p412 = scmp.ne.s32.totalorder %s400, %s401
      %p413 = scmp.eq.s32.totalorder %s46, 1
      %p414 = por %p412, %p413
      %p416 = scmp.ne.s32.totalorder %s401, %s415
      %p417 = scmp.eq.s32.totalorder %s46, 0
      %p418 = por %p416, %p417
      %s420 = sadd.s32 %s419, 1
      %p423 = scmp.eq.s32.totalorder %s40, 1
      %p424 = scmp.ne.s32.totalorder %s419, %s421
      %p425 = scmp.eq.s32.totalorder %s40, 0
      %p426 = por %p424, %p425
      %p427 = scmp.ne.s32.totalorder %s419, %s421
      %p428 = scmp.eq.s32.totalorder %s45, 1
      %p429 = por %p427, %p428
      %p430 = scmp.ne.s32.totalorder %s421, %s422
      %p431 = scmp.eq.s32.totalorder %s45, 0
      %p432 = por %p430, %p431
      %p433 = scmp.ne.s32.totalorder %s421, %s422
      %p434 = scmp.eq.s32.totalorder %s46, 1
      %p435 = por %p433, %p434
      %p437 = scmp.ne.s32.totalorder %s422, %s436
      %p438 = scmp.eq.s32.totalorder %s46, 0
      %p439 = por %p437, %p438
      %s441 = sadd.s32 %s440, 1
      %p444 = scmp.eq.s32.totalorder %s40, 1
      %p445 = scmp.ne.s32.totalorder %s440, %s442
      %p446 = scmp.eq.s32.totalorder %s40, 0
      %p447 = por %p445, %p446
      %p448 = scmp.ne.s32.totalorder %s440, %s442
      %p449 = scmp.eq.s32.totalorder %s45, 1
      %p450 = por %p448, %p449
      %p451 = scmp.ne.s32.totalorder %s442, %s443
      %p452 = scmp.eq.s32.totalorder %s45, 0
      %p453 = por %p451, %p452
      %p454 = scmp.ne.s32.totalorder %s442, %s443
      %p455 = scmp.eq.s32.totalorder %s46, 1
      %p456 = por %p454, %p455
      %p458 = scmp.ne.s32.totalorder %s443, %s457
      %p459 = scmp.eq.s32.totalorder %s46, 0
      %p460 = por %p458, %p459
      %s462 = sadd.s32 %s461, 1
      %p465 = scmp.eq.s32.totalorder %s40, 1
      %p466 = scmp.ne.s32.totalorder %s461, %s463
      %p467 = scmp.eq.s32.totalorder %s40, 0
      %p468 = por %p466, %p467
      %p469 = scmp.ne.s32.totalorder %s461, %s463
      %p470 = scmp.eq.s32.totalorder %s45, 1
      %p471 = por %p469, %p470
      %p472 = scmp.ne.s32.totalorder %s463, %s464
      %p473 = scmp.eq.s32.totalorder %s45, 0
      %p474 = por %p472, %p473
      %p475 = scmp.ne.s32.totalorder %s463, %s464
      %p476 = scmp.eq.s32.totalorder %s46, 1
      %p477 = por %p475, %p476
      %p479 = scmp.ne.s32.totalorder %s464, %s478
      %p480 = scmp.eq.s32.totalorder %s46, 0
      %p481 = por %p479, %p480
      %s483 = sadd.s32 %s482, 1
      %p486 = scmp.eq.s32.totalorder %s40, 1
      %p487 = scmp.ne.s32.totalorder %s482, %s484
      %p488 = scmp.eq.s32.totalorder %s40, 0
      %p489 = por %p487, %p488
      %p490 = scmp.ne.s32.totalorder %s482, %s484
      %p491 = scmp.eq.s32.totalorder %s45, 1
      %p492 = por %p490, %p491
      %p493 = scmp.ne.s32.totalorder %s484, %s485
      %p494 = scmp.eq.s32.totalorder %s45, 0
      %p495 = por %p493, %p494
      %p496 = scmp.ne.s32.totalorder %s484, %s485
      %p497 = scmp.eq.s32.totalorder %s46, 1
      %p498 = por %p496, %p497
      %p500 = scmp.ne.s32.totalorder %s485, %s499
      %p501 = scmp.eq.s32.totalorder %s46, 0
      %p502 = por %p500, %p501
      %s504 = sadd.s32 %s503, 1
      %p507 = scmp.eq.s32.totalorder %s40, 1
      %p508 = scmp.ne.s32.totalorder %s503, %s505
      %p509 = scmp.eq.s32.totalorder %s40, 0
      %p510 = por %p508, %p509
      %p511 = scmp.ne.s32.totalorder %s503, %s505
      %p512 = scmp.eq.s32.totalorder %s45, 1
      %p513 = por %p511, %p512
      %p514 = scmp.ne.s32.totalorder %s505, %s506
      %p515 = scmp.eq.s32.totalorder %s45, 0
      %p516 = por %p514, %p515
      %p517 = scmp.ne.s32.totalorder %s505, %s506
      %p518 = scmp.eq.s32.totalorder %s46, 1
      %p519 = por %p517, %p518
      %p521 = scmp.ne.s32.totalorder %s506, %s520
      %p522 = scmp.eq.s32.totalorder %s46, 0
      %p523 = por %p521, %p522
      %s525 = sadd.s32 %s524, 1
      %p528 = scmp.eq.s32.totalorder %s40, 1
      %p529 = scmp.ne.s32.totalorder %s524, %s526
      %p530 = scmp.eq.s32.totalorder %s40, 0
      %p531 = por %p529, %p530
      %p532 = scmp.ne.s32.totalorder %s524, %s526
      %p533 = scmp.eq.s32.totalorder %s45, 1
      %p534 = por %p532, %p533
      %p535 = scmp.ne.s32.totalorder %s526, %s527
      %p536 = scmp.eq.s32.totalorder %s45, 0
      %p537 = por %p535, %p536
      %p538 = scmp.ne.s32.totalorder %s526, %s527
      %p539 = scmp.eq.s32.totalorder %s46, 1
      %p540 = por %p538, %p539
      %p542 = scmp.ne.s32.totalorder %s527, %s541
      %p543 = scmp.eq.s32.totalorder %s46, 0
      %p544 = por %p542, %p543
      %s546 = sadd.s32 %s545, 1
      %p549 = scmp.eq.s32.totalorder %s40, 1
      %p550 = scmp.ne.s32.totalorder %s545, %s547
      %p551 = scmp.eq.s32.totalorder %s40, 0
      %p552 = por %p550, %p551
      %p553 = scmp.ne.s32.totalorder %s545, %s547
      %p554 = scmp.eq.s32.totalorder %s45, 1
      %p555 = por %p553, %p554
      %p556 = scmp.ne.s32.totalorder %s547, %s548
      %p557 = scmp.eq.s32.totalorder %s45, 0
      %p558 = por %p556, %p557
      %p559 = scmp.ne.s32.totalorder %s547, %s548
      %p560 = scmp.eq.s32.totalorder %s46, 1
      %p561 = por %p559, %p560
      %p563 = scmp.ne.s32.totalorder %s548, %s562
      %p564 = scmp.eq.s32.totalorder %s46, 0
      %p565 = por %p563, %p564
      %s567 = sadd.s32 %s566, 1
      %p570 = scmp.eq.s32.totalorder %s40, 1
      %p571 = scmp.ne.s32.totalorder %s566, %s568
      %p572 = scmp.eq.s32.totalorder %s40, 0
      %p573 = por %p571, %p572
      %p574 = scmp.ne.s32.totalorder %s566, %s568
      %p575 = scmp.eq.s32.totalorder %s45, 1
      %p576 = por %p574, %p575
      %p577 = scmp.ne.s32.totalorder %s568, %s569
      %p578 = scmp.eq.s32.totalorder %s45, 0
      %p579 = por %p577, %p578
      %p580 = scmp.ne.s32.totalorder %s568, %s569
      %p581 = scmp.eq.s32.totalorder %s46, 1
      %p582 = por %p580, %p581
      %p584 = scmp.ne.s32.totalorder %s569, %s583
      %p585 = scmp.eq.s32.totalorder %s46, 0
      %p586 = por %p584, %p585
      %s588 = sadd.s32 %s587, 1
      %p591 = scmp.eq.s32.totalorder %s40, 1
      %p592 = scmp.ne.s32.totalorder %s587, %s589
      %p593 = scmp.eq.s32.totalorder %s40, 0
      %p594 = por %p592, %p593
      %p595 = scmp.ne.s32.totalorder %s587, %s589
      %p596 = scmp.eq.s32.totalorder %s45, 1
      %p597 = por %p595, %p596
      %p598 = scmp.ne.s32.totalorder %s589, %s590
      %p599 = scmp.eq.s32.totalorder %s45, 0
      %p600 = por %p598, %p599
      %p601 = scmp.ne.s32.totalorder %s589, %s590
      %p602 = scmp.eq.s32.totalorder %s46, 1
      %p603 = por %p601, %p602
      %p605 = scmp.ne.s32.totalorder %s590, %s604
      %p606 = scmp.eq.s32.totalorder %s46, 0
      %p607 = por %p605, %p606
      %s609 = sadd.s32 %s608, 1
      %p612 = scmp.eq.s32.totalorder %s40, 1
      %p613 = scmp.ne.s32.totalorder %s608, %s610
      %p614 = scmp.eq.s32.totalorder %s40, 0
      %p615 = por %p613, %p614
      %p616 = scmp.ne.s32.totalorder %s608, %s610
      %p617 = scmp.eq.s32.totalorder %s45, 1
      %p618 = por %p616, %p617
      %p619 = scmp.ne.s32.totalorder %s610, %s611
      %p620 = scmp.eq.s32.totalorder %s45, 0
      %p621 = por %p619, %p620
      %p622 = scmp.ne.s32.totalorder %s610, %s611
      %p623 = scmp.eq.s32.totalorder %s46, 1
      %p624 = por %p622, %p623
      %p626 = scmp.ne.s32.totalorder %s611, %s625
      %p627 = scmp.eq.s32.totalorder %s46, 0
      %p628 = por %p626, %p627
      %s630 = sadd.s32 %s629, 1
      %p633 = scmp.eq.s32.totalorder %s40, 1
      %p634 = scmp.ne.s32.totalorder %s629, %s631
      %p635 = scmp.eq.s32.totalorder %s40, 0
      %p636 = por %p634, %p635
      %p637 = scmp.ne.s32.totalorder %s629, %s631
      %p638 = scmp.eq.s32.totalorder %s45, 1
      %p639 = por %p637, %p638
      %p640 = scmp.ne.s32.totalorder %s631, %s632
      %p641 = scmp.eq.s32.totalorder %s45, 0
      %p642 = por %p640, %p641
      %p643 = scmp.ne.s32.totalorder %s631, %s632
      %p644 = scmp.eq.s32.totalorder %s46, 1
      %p645 = por %p643, %p644
      %p647 = scmp.ne.s32.totalorder %s632, %s646
      %p648 = scmp.eq.s32.totalorder %s46, 0
      %p649 = por %p647, %p648
      %s651 = sadd.s32 %s650, 1
      %p654 = scmp.eq.s32.totalorder %s40, 1
      %p655 = scmp.ne.s32.totalorder %s650, %s652
      %p656 = scmp.eq.s32.totalorder %s40, 0
      %p657 = por %p655, %p656
      %p658 = scmp.ne.s32.totalorder %s650, %s652
      %p659 = scmp.eq.s32.totalorder %s45, 1
      %p660 = por %p658, %p659
      %p661 = scmp.ne.s32.totalorder %s652, %s653
      %p662 = scmp.eq.s32.totalorder %s45, 0
      %p663 = por %p661, %p662
      %p664 = scmp.ne.s32.totalorder %s652, %s653
      %p665 = scmp.eq.s32.totalorder %s46, 1
      %p666 = por %p664, %p665
      %p668 = scmp.ne.s32.totalorder %s653, %s667
      %p669 = scmp.eq.s32.totalorder %s46, 0
      %p670 = por %p668, %p669
      %p671 = scmp.le.s32.totalorder 1, %s40
      %p672 = scmp.lt.s32.totalorder %s40, 3
      %p673 = pnand %p671, %p672
      %p674 = pneg %p673
      // Predicated region
      $region9: #{tpu_custom_call.1} parent=5 // pred_check
        _
      $region10: #{tpu_custom_call.1} parent=5 // pred_check_branch
        %676 = sbr.rel (%p673) target = $region12
      $region11: #{tpu_custom_call.1} parent=5 // pred_region
        %s677 = ssub.s32 %s40, 1
        // Predicated region
        $region13: #{tpu_custom_call.1} parent=11 // pred_check
          %p678 = pneg %p243
        $region14: #{tpu_custom_call.1} parent=11 // pred_check_branch
          %680 = sbr.rel (%p678) target = $region16
        $region15: #{tpu_custom_call.1} parent=11 // pred_region
          _
        $region16: #{tpu_custom_call.1} parent=11 // pred_fallthru
          _
        // Predicated region
        $region17: #{tpu_custom_call.1} parent=11 // pred_check
          %p681 = pneg %p264
        $region18: #{tpu_custom_call.1} parent=11 // pred_check_branch
          %683 = sbr.rel (%p681) target = $region20
        $region19: #{tpu_custom_call.1} parent=11 // pred_region
          _
        $region20: #{tpu_custom_call.1} parent=11 // pred_fallthru
          _
        // Predicated region
        $region21: #{tpu_custom_call.1} parent=11 // pred_check
          %p684 = pneg %p285
        $region22: #{tpu_custom_call.1} parent=11 // pred_check_branch
          %686 = sbr.rel (%p684) target = $region24
        $region23: #{tpu_custom_call.1} parent=11 // pred_region
          _
        $region24: #{tpu_custom_call.1} parent=11 // pred_fallthru
          _
        // Predicated region
        $region25: #{tpu_custom_call.1} parent=11 // pred_check
          %p687 = pneg %p306
        $region26: #{tpu_custom_call.1} parent=11 // pred_check_branch
          %689 = sbr.rel (%p687) target = $region28
        $region27: #{tpu_custom_call.1} parent=11 // pred_region
          _
        $region28: #{tpu_custom_call.1} parent=11 // pred_fallthru
          _
        // Predicated region
        $region29: #{tpu_custom_call.1} parent=11 // pred_check
          %p690 = pneg %p327
        $region30: #{tpu_custom_call.1} parent=11 // pred_check_branch
          %692 = sbr.rel (%p690) target = $region32
        $region31: #{tpu_custom_call.1} parent=11 // pred_region
          _
        $region32: #{tpu_custom_call.1} parent=11 // pred_fallthru
          _
        // Predicated region
        $region33: #{tpu_custom_call.1} parent=11 // pred_check
          %p693 = pneg %p348
        $region34: #{tpu_custom_call.1} parent=11 // pred_check_branch
          %695 = sbr.rel (%p693) target = $region36
        $region35: #{tpu_custom_call.1} parent=11 // pred_region
          _
        $region36: #{tpu_custom_call.1} parent=11 // pred_fallthru
          _
        // Predicated region
        $region37: #{tpu_custom_call.1} parent=11 // pred_check
          %p696 = pneg %p369
        $region38: #{tpu_custom_call.1} parent=11 // pred_check_branch
          %698 = sbr.rel (%p696) target = $region40
        $region39: #{tpu_custom_call.1} parent=11 // pred_region
          _
        $region40: #{tpu_custom_call.1} parent=11 // pred_fallthru
          _
        // Predicated region
        $region41: #{tpu_custom_call.1} parent=11 // pred_check
          %p699 = pneg %p390
        $region42: #{tpu_custom_call.1} parent=11 // pred_check_branch
          %701 = sbr.rel (%p699) target = $region44
        $region43: #{tpu_custom_call.1} parent=11 // pred_region
          _
        $region44: #{tpu_custom_call.1} parent=11 // pred_fallthru
          _
        // Predicated region
        $region45: #{tpu_custom_call.1} parent=11 // pred_check
          %p702 = pneg %p411
        $region46: #{tpu_custom_call.1} parent=11 // pred_check_branch
          %704 = sbr.rel (%p702) target = $region48
        $region47: #{tpu_custom_call.1} parent=11 // pred_region
          _
        $region48: #{tpu_custom_call.1} parent=11 // pred_fallthru
          _
        // Predicated region
        $region49: #{tpu_custom_call.1} parent=11 // pred_check
          %p705 = pneg %p432
        $region50: #{tpu_custom_call.1} parent=11 // pred_check_branch
          %707 = sbr.rel (%p705) target = $region52
        $region51: #{tpu_custom_call.1} parent=11 // pred_region
          _
        $region52: #{tpu_custom_call.1} parent=11 // pred_fallthru
          _
        // Predicated region
        $region53: #{tpu_custom_call.1} parent=11 // pred_check
          %p708 = pneg %p453
        $region54: #{tpu_custom_call.1} parent=11 // pred_check_branch
          %710 = sbr.rel (%p708) target = $region56
        $region55: #{tpu_custom_call.1} parent=11 // pred_region
          _
        $region56: #{tpu_custom_call.1} parent=11 // pred_fallthru
          _
        // Predicated region
        $region57: #{tpu_custom_call.1} parent=11 // pred_check
          %p711 = pneg %p474
        $region58: #{tpu_custom_call.1} parent=11 // pred_check_branch
          %713 = sbr.rel (%p711) target = $region60
        $region59: #{tpu_custom_call.1} parent=11 // pred_region
          _
        $region60: #{tpu_custom_call.1} parent=11 // pred_fallthru
          _
        // Predicated region
        $region61: #{tpu_custom_call.1} parent=11 // pred_check
          %p714 = pneg %p495
        $region62: #{tpu_custom_call.1} parent=11 // pred_check_branch
          %716 = sbr.rel (%p714) target = $region64
        $region63: #{tpu_custom_call.1} parent=11 // pred_region
          _
        $region64: #{tpu_custom_call.1} parent=11 // pred_fallthru
          _
        // Predicated region
        $region65: #{tpu_custom_call.1} parent=11 // pred_check
          %p717 = pneg %p516
        $region66: #{tpu_custom_call.1} parent=11 // pred_check_branch
          %719 = sbr.rel (%p717) target = $region68
        $region67: #{tpu_custom_call.1} parent=11 // pred_region
          _
        $region68: #{tpu_custom_call.1} parent=11 // pred_fallthru
          _
        // Predicated region
        $region69: #{tpu_custom_call.1} parent=11 // pred_check
          %p720 = pneg %p537
        $region70: #{tpu_custom_call.1} parent=11 // pred_check_branch
          %722 = sbr.rel (%p720) target = $region72
        $region71: #{tpu_custom_call.1} parent=11 // pred_region
          _
        $region72: #{tpu_custom_call.1} parent=11 // pred_fallthru
          _
        // Predicated region
        $region73: #{tpu_custom_call.1} parent=11 // pred_check
          %p723 = pneg %p558
        $region74: #{tpu_custom_call.1} parent=11 // pred_check_branch
          %725 = sbr.rel (%p723) target = $region76
        $region75: #{tpu_custom_call.1} parent=11 // pred_region
          _
        $region76: #{tpu_custom_call.1} parent=11 // pred_fallthru
          _
        // Predicated region
        $region77: #{tpu_custom_call.1} parent=11 // pred_check
          %p726 = pneg %p579
        $region78: #{tpu_custom_call.1} parent=11 // pred_check_branch
          %728 = sbr.rel (%p726) target = $region80
        $region79: #{tpu_custom_call.1} parent=11 // pred_region
          _
        $region80: #{tpu_custom_call.1} parent=11 // pred_fallthru
          _
        // Predicated region
        $region81: #{tpu_custom_call.1} parent=11 // pred_check
          %p729 = pneg %p600
        $region82: #{tpu_custom_call.1} parent=11 // pred_check_branch
          %731 = sbr.rel (%p729) target = $region84
        $region83: #{tpu_custom_call.1} parent=11 // pred_region
          _
        $region84: #{tpu_custom_call.1} parent=11 // pred_fallthru
          _
        // Predicated region
        $region85: #{tpu_custom_call.1} parent=11 // pred_check
          %p732 = pneg %p621
        $region86: #{tpu_custom_call.1} parent=11 // pred_check_branch
          %734 = sbr.rel (%p732) target = $region88
        $region87: #{tpu_custom_call.1} parent=11 // pred_region
          _
        $region88: #{tpu_custom_call.1} parent=11 // pred_fallthru
          _
        // Predicated region
        $region89: #{tpu_custom_call.1} parent=11 // pred_check
          %p735 = pneg %p642
        $region90: #{tpu_custom_call.1} parent=11 // pred_check_branch
          %737 = sbr.rel (%p735) target = $region92
        $region91: #{tpu_custom_call.1} parent=11 // pred_region
          _
        $region92: #{tpu_custom_call.1} parent=11 // pred_fallthru
          _
      $region12: #{tpu_custom_call.1} parent=5 // pred_fallthru
        _
      %p738 = scmp.lt.s32.totalorder %s40, 2
      // Predicated region
      $region93: #{tpu_custom_call.1} parent=5 // pred_check
        %p739 = pneg %p738
      $region94: #{tpu_custom_call.1} parent=5 // pred_check_branch
        %741 = sbr.rel (%p739) target = $region96
      $region95: #{tpu_custom_call.1} parent=5 // pred_region
        // Predicated region
        $region97: #{tpu_custom_call.1} parent=95 // pred_check
          %p742 = pneg %p60
        $region98: #{tpu_custom_call.1} parent=95 // pred_check_branch
          %744 = sbr.rel (%p742) target = $region100
        $region99: #{tpu_custom_call.1} parent=95 // pred_region
          %p745 = scmp.lt.s32.totalorder %s40, 1
          %s746 = scalar_select %p745, %s40, 1
          %s747 = smul.addr %s746, 2
          %s748 = scalar_lea.vmem %s0, %s747
        $region100: #{tpu_custom_call.1} parent=95 // pred_fallthru
          _
        // Predicated region
        $region101: #{tpu_custom_call.1} parent=95 // pred_check
          %p749 = pneg %p86
        $region102: #{tpu_custom_call.1} parent=95 // pred_check_branch
          %751 = sbr.rel (%p749) target = $region104
        $region103: #{tpu_custom_call.1} parent=95 // pred_region
          %p752 = scmp.lt.s32.totalorder %s40, 1
          %s753 = scalar_select %p752, %s40, 1
          %s754 = smul.addr %s753, 2
          %s755 = scalar_lea.vmem %s1, %s754
        $region104: #{tpu_custom_call.1} parent=95 // pred_fallthru
          _
        // Predicated region
        $region105: #{tpu_custom_call.1} parent=95 // pred_check
          %p756 = pneg %p112
        $region106: #{tpu_custom_call.1} parent=95 // pred_check_branch
          %758 = sbr.rel (%p756) target = $region108
        $region107: #{tpu_custom_call.1} parent=95 // pred_region
          %p759 = scmp.lt.s32.totalorder %s40, 1
          %s760 = scalar_select %p759, %s40, 1
          %s761 = smul.addr %s760, 2
          %s762 = scalar_lea.vmem %s2, %s761
        $region108: #{tpu_custom_call.1} parent=95 // pred_fallthru
          _
        // Predicated region
        $region109: #{tpu_custom_call.1} parent=95 // pred_check
          %p763 = pneg %p138
        $region110: #{tpu_custom_call.1} parent=95 // pred_check_branch
          %765 = sbr.rel (%p763) target = $region112
        $region111: #{tpu_custom_call.1} parent=95 // pred_region
          %p766 = scmp.lt.s32.totalorder %s40, 1
          %s767 = scalar_select %p766, %s40, 1
          %s768 = smul.addr %s767, 2
          %s769 = scalar_lea.vmem %s3, %s768
        $region112: #{tpu_custom_call.1} parent=95 // pred_fallthru
          _
        // Predicated region
        $region113: #{tpu_custom_call.1} parent=95 // pred_check
          %p770 = pneg %p164
        $region114: #{tpu_custom_call.1} parent=95 // pred_check_branch
          %772 = sbr.rel (%p770) target = $region116
        $region115: #{tpu_custom_call.1} parent=95 // pred_region
          %p773 = scmp.lt.s32.totalorder %s40, 1
          %s774 = scalar_select %p773, %s40, 1
          %s775 = scalar_lea.vmem %s4, %s774
        $region116: #{tpu_custom_call.1} parent=95 // pred_fallthru
          _
        // Predicated region
        $region117: #{tpu_custom_call.1} parent=95 // pred_check
          %p776 = pneg %p190
        $region118: #{tpu_custom_call.1} parent=95 // pred_check_branch
          %778 = sbr.rel (%p776) target = $region120
        $region119: #{tpu_custom_call.1} parent=95 // pred_region
          %p779 = scmp.lt.s32.totalorder %s40, 1
          %s780 = scalar_select %p779, %s40, 1
          %s781 = smul.addr %s780, 4
          %s782 = smul.addr %s781, 4
          %s783 = scalar_lea.vmem %s5, %s782
        $region120: #{tpu_custom_call.1} parent=95 // pred_fallthru
          _
        // Predicated region
        $region121: #{tpu_custom_call.1} parent=95 // pred_check
          %p784 = pneg %p216
        $region122: #{tpu_custom_call.1} parent=95 // pred_check_branch
          %786 = sbr.rel (%p784) target = $region124
        $region123: #{tpu_custom_call.1} parent=95 // pred_region
          %p787 = scmp.lt.s32.totalorder %s40, 1
          %s788 = scalar_select %p787, %s40, 1
          %s789 = scalar_lea.vmem %s6, %s788
        $region124: #{tpu_custom_call.1} parent=95 // pred_fallthru
          _
      $region96: #{tpu_custom_call.1} parent=5 // pred_fallthru
        _
      %p790 = scmp.le.s32.totalorder 1, %s40
      %p791 = scmp.lt.s32.totalorder %s40, 3
      %p792 = pnand %p790, %p791
      %p793 = pneg %p792
      // Predicated region
      $region125: #{tpu_custom_call.1} parent=5 // pred_check
        _
      $region126: #{tpu_custom_call.1} parent=5 // pred_check_branch
        %795 = sbr.rel (%p792) target = $region128
      $region127: #{tpu_custom_call.1} parent=5 // pred_region
        %s796 = ssub.s32 %s40, 1
        %p797 = scmp.lt.s32.totalorder %s45, 1
        %s798 = scalar_select %p797, %s45, 1
        %s799 = smul.addr %s798, 2
        %s800 = scalar_lea.vmem %s0, %s799
        %p801 = pneg %p66
        %p802 = pneg %p63
        %p803 = scmp.lt.s32.totalorder %s45, 1
        %s804 = scalar_select %p803, %s45, 1
        %s805 = smul.addr %s804, 2
        %s806 = scalar_lea.vmem %s1, %s805
        %p807 = pneg %p92
        %p808 = pneg %p89
        %p809 = scmp.lt.s32.totalorder %s45, 1
        %s810 = scalar_select %p809, %s45, 1
        %s811 = smul.addr %s810, 2
        %s812 = scalar_lea.vmem %s2, %s811
        %p813 = pneg %p118
        %p814 = pneg %p115
        %p815 = scmp.lt.s32.totalorder %s45, 1
        %s816 = scalar_select %p815, %s45, 1
        %s817 = smul.addr %s816, 2
        %s818 = scalar_lea.vmem %s3, %s817
        %p819 = pneg %p144
        %p820 = pneg %p141
        %p821 = scmp.lt.s32.totalorder %s45, 1
        %s822 = scalar_select %p821, %s45, 1
        %s823 = scalar_lea.vmem %s4, %s822
        %p824 = pneg %p170
        %p825 = pneg %p167
        %p826 = scmp.lt.s32.totalorder %s45, 1
        %s827 = scalar_select %p826, %s45, 1
        %s828 = smul.addr %s827, 4
        %s829 = smul.addr %s828, 4
        %s830 = scalar_lea.vmem %s5, %s829
        %p831 = pneg %p196
        %p832 = pneg %p193
        %p833 = scmp.lt.s32.totalorder %s45, 1
        %s834 = scalar_select %p833, %s45, 1
        %s835 = scalar_lea.vmem %s6, %s834
        %p836 = pneg %p222
        %p837 = pneg %p219
        %p838 = pneg %p243
        %p839 = pneg %p240
        %p840 = pneg %p264
        %p841 = pneg %p261
        %p842 = pneg %p285
        %p843 = pneg %p282
        %p844 = pneg %p306
        %p845 = pneg %p303
        %p846 = pneg %p327
        %p847 = pneg %p324
        %p848 = pneg %p348
        %p849 = pneg %p345
        %p850 = pneg %p369
        %p851 = pneg %p366
        %p852 = pneg %p390
        %p853 = pneg %p387
        %p854 = pneg %p411
        %p855 = pneg %p408
        %p856 = pneg %p432
        %p857 = pneg %p429
        %p858 = pneg %p453
        %p859 = pneg %p450
        %p860 = pneg %p474
        %p861 = pneg %p471
        %p862 = pneg %p495
        %p863 = pneg %p492
        %p864 = pneg %p516
        %p865 = pneg %p513
        %p866 = pneg %p537
        %p867 = pneg %p534
        %p868 = pneg %p558
        %p869 = pneg %p555
        %p870 = pneg %p579
        %p871 = pneg %p576
        %p872 = pneg %p600
        %p873 = pneg %p597
        %p874 = pneg %p621
        %p875 = pneg %p618
        %p876 = pneg %p642
        %p877 = pneg %p639
        %p878 = pneg %p663
        %p879 = pneg %p660
        %p880 = scmp.lt.s32.totalorder %s45, 1
        %s881 = scalar_select %p880, %s45, 1
        %s882 = smul.addr %s881, 2
        %s883 = scalar_lea.vmem %s0, %s882
        %p884 = scmp.lt.s32.totalorder %s45, 1
        %s885 = scalar_select %p884, %s45, 1
        %s886 = smul.addr %s885, 2
        %s887 = scalar_lea.vmem %s1, %s886
        %p888 = scmp.lt.s32.totalorder %s45, 1
        %s889 = scalar_select %p888, %s45, 1
        %s890 = smul.addr %s889, 2
        %s891 = scalar_lea.vmem %s2, %s890
        %p892 = scmp.lt.s32.totalorder %s45, 1
        %s893 = scalar_select %p892, %s45, 1
        %s894 = smul.addr %s893, 2
        %s895 = scalar_lea.vmem %s3, %s894
        %p896 = scmp.lt.s32.totalorder %s45, 1
        %s897 = scalar_select %p896, %s45, 1
        %s898 = scalar_lea.vmem %s4, %s897
        %p899 = scmp.lt.s32.totalorder %s45, 1
        %s900 = scalar_select %p899, %s45, 1
        %s901 = smul.addr %s900, 4
        %s902 = smul.addr %s901, 4
        %s903 = scalar_lea.vmem %s5, %s902
        %p904 = scmp.lt.s32.totalorder %s45, 1
        %s905 = scalar_select %p904, %s45, 1
        %s906 = scalar_lea.vmem %s6, %s905
        %p908 = scmp.eq.s32.totalorder %s45, 0
        // Predicated region
        $region129: #{tpu_custom_call.1} parent=127 // pred_check
          %p909 = pneg %p908
        $region130: #{tpu_custom_call.1} parent=127 // pred_check_branch
          %911 = sbr.rel (%p909) target = $region132
        $region131: #{tpu_custom_call.1} parent=127 // pred_region
          %vm912 = vcmask 0
          %913 = vst.msk [vmem:[#allocation5] sm:$0x1] %vm912, 0.0
        $region132: #{tpu_custom_call.1} parent=127 // pred_fallthru
          _
        %v914 = vld [vmem:[%s903] sm:$0xf]
        %v915 = vld [vmem:[%s903 + $0x4] sm:$0xf]
        %v916 = vld [vmem:[%s903 + $0x8] sm:$0xf]
        %v917 = vld [vmem:[%s903 + $0xc] sm:$0xf]
        %v918 = vld [vmem:[%s8] sm:$0xf]
        %v919 = vld [vmem:[%s8 + $0x4] sm:$0xf]
        %v920 = vld [vmem:[%s8 + $0x8] sm:$0xf]
        %v921 = vld [vmem:[%s8 + $0xc] sm:$0xf]
        %v922 = vld [vmem:[%s8 + $0x10] sm:$0xf]
        %v923 = vld [vmem:[%s8 + $0x14] sm:$0xf]
        %v924 = vld [vmem:[%s8 + $0x18] sm:$0xf]
        %v925 = vld [vmem:[%s8 + $0x1c] sm:$0xf]
        %v926 = vld [vmem:[%s8 + $0x20] sm:$0xf]
        %v927 = vld [vmem:[%s8 + $0x24] sm:$0xf]
        %v928 = vld [vmem:[%s8 + $0x28] sm:$0xf]
        %v929 = vld [vmem:[%s8 + $0x2c] sm:$0xf]
        %v930 = vld [vmem:[%s8 + $0x30] sm:$0xf]
        %v931 = vld [vmem:[%s8 + $0x34] sm:$0xf]
        %v932 = vld [vmem:[%s8 + $0x38] sm:$0xf]
        %v933 = vld [vmem:[%s8 + $0x3c] sm:$0xf]
        %v934 = vld [vmem:[%s9] sm:$0xff]
        %v935 = vld [vmem:[%s9 + $0x8] sm:$0xff]
        %v936 = vld [vmem:[%s9 + $0x10] sm:$0xff]
        %v937 = vld [vmem:[%s9 + $0x18] sm:$0xff]
        %v938 = vld [vmem:[%s9 + $0x20] sm:$0xff]
        %v939 = vld [vmem:[%s9 + $0x28] sm:$0xff]
        %v940 = vld [vmem:[%s9 + $0x30] sm:$0xff]
        %v941 = vld [vmem:[%s9 + $0x38] sm:$0xff]
        %v942 = vld [vmem:[%s9 + $0x40] sm:$0xff]
        %v943 = vld [vmem:[%s9 + $0x48] sm:$0xff]
        %v944 = vld [vmem:[%s9 + $0x50] sm:$0xff]
        %v945 = vld [vmem:[%s9 + $0x58] sm:$0xff]
        %v946 = vld [vmem:[%s9 + $0x60] sm:$0xff]
        %v947 = vld [vmem:[%s9 + $0x68] sm:$0xff]
        %v948 = vld [vmem:[%s9 + $0x70] sm:$0xff]
        %v949 = vld [vmem:[%s9 + $0x78] sm:$0xff]
        %v966 = vunpack.c.l.b16 %v918
        %v967 = vunpack.c.l.b16 %v919
        %v968 = vunpack.c.l.b16 %v920
        %v969 = vunpack.c.l.b16 %v921
        %v970 = vunpack.c.l.b16 %v922
        %v971 = vunpack.c.l.b16 %v923
        %v972 = vunpack.c.l.b16 %v924
        %v973 = vunpack.c.l.b16 %v925
        %v974 = vunpack.c.l.b16 %v926
        %v975 = vunpack.c.l.b16 %v927
        %v976 = vunpack.c.l.b16 %v928
        %v977 = vunpack.c.l.b16 %v929
        %v978 = vunpack.c.l.b16 %v930
        %v979 = vunpack.c.l.b16 %v931
        %v980 = vunpack.c.l.b16 %v932
        %v981 = vunpack.c.l.b16 %v933
        %v982 = vpack.c.b16 %v967, %v966
        %v983 = vpack.c.b16 %v969, %v968
        %v984 = vpack.c.b16 %v971, %v970
        %v985 = vpack.c.b16 %v973, %v972
        %v986 = vpack.c.b16 %v975, %v974
        %v987 = vpack.c.b16 %v977, %v976
        %v988 = vpack.c.b16 %v979, %v978
        %v989 = vpack.c.b16 %v981, %v980
        %v994 = vunpack.c.l.b16 %v914
        %v995 = vunpack.c.l.b16 %v915
        %v996 = vunpack.c.l.b16 %v916
        %v997 = vunpack.c.l.b16 %v917
        %v998 = vpack.c.b16 %v995, %v994
        %v999 = vpack.c.b16 %v997, %v996
        %vm1002 = vcmask 261120
        %v1004 = vsel %vm1002, %v982, 0
        %v1007 = vsel %vm1002, %v983, 0
        %v1010 = vsel %vm1002, %v984, 0
        %v1013 = vsel %vm1002, %v985, 0
        %v1016 = vsel %vm1002, %v986, 0
        %v1019 = vsel %vm1002, %v987, 0
        %v1022 = vsel %vm1002, %v988, 0
        %v1025 = vsel %vm1002, %v989, 0
        %1027 = vmatpush.bf16.msra.mxu0 0
        %1028 = vmatpush.bf16.msra.mxu0 0
        %1029 = vmatpush.bf16.msra.mxu0 0
        %1030 = vmatpush.bf16.msra.mxu0 0
        %1031 = vmatpush.bf16.msra.mxu0 0
        %1032 = vmatpush.bf16.msra.mxu0 0
        %1033 = vmatpush.bf16.msra.mxu0 %v999
        %1034 = vmatpush.bf16.msra.mxu0 %v998
        %1035 = vmatmul.bf16.gmra.mxu0 %v1004
        %v1036 = vpop.f32.mrf.mxu0
        %v1037 = vadd.f32 %v934, %v1036
        %v1038 = vpop.f32.mrf.mxu0
        %v1039 = vadd.f32 %v935, %v1038
        %1040 = vmatmul.bf16.gmra.mxu0 %v1007
        %v1041 = vpop.f32.mrf.mxu0
        %v1042 = vadd.f32 %v936, %v1041
        %v1043 = vpop.f32.mrf.mxu0
        %v1044 = vadd.f32 %v937, %v1043
        %1045 = vmatmul.bf16.gmra.mxu0 %v1010
        %v1046 = vpop.f32.mrf.mxu0
        %v1047 = vadd.f32 %v938, %v1046
        %v1048 = vpop.f32.mrf.mxu0
        %v1049 = vadd.f32 %v939, %v1048
        %1050 = vmatmul.bf16.gmra.mxu0 %v1013
        %v1051 = vpop.f32.mrf.mxu0
        %v1052 = vadd.f32 %v940, %v1051
        %v1053 = vpop.f32.mrf.mxu0
        %v1054 = vadd.f32 %v941, %v1053
        %1055 = vmatmul.bf16.gmra.mxu0 %v1016
        %v1056 = vpop.f32.mrf.mxu0
        %v1057 = vadd.f32 %v942, %v1056
        %v1058 = vpop.f32.mrf.mxu0
        %v1059 = vadd.f32 %v943, %v1058
        %1060 = vmatmul.bf16.gmra.mxu0 %v1019
        %v1061 = vpop.f32.mrf.mxu0
        %v1062 = vadd.f32 %v944, %v1061
        %v1063 = vpop.f32.mrf.mxu0
        %v1064 = vadd.f32 %v945, %v1063
        %1065 = vmatmul.bf16.gmra.mxu0 %v1022
        %v1066 = vpop.f32.mrf.mxu0
        %v1067 = vadd.f32 %v946, %v1066
        %v1068 = vpop.f32.mrf.mxu0
        %v1069 = vadd.f32 %v947, %v1068
        %1070 = vmatmul.bf16.gmra.mxu0 %v1025
        %v1071 = vpop.f32.mrf.mxu0
        %v1072 = vadd.f32 %v948, %v1071
        %v1073 = vpop.f32.mrf.mxu0
        %v1074 = vadd.f32 %v949, %v1073
        %1075 = vdwg.mxu0
        %v1076 = vld [vmem:[%s883] sm:$0x3]
        %v1077 = vld [vmem:[%s7] sm:$0xf]
        %v1078 = vld [vmem:[%s7 + $0x4] sm:$0xf]
        %v1079 = vld [vmem:[%s7 + $0x8] sm:$0xf]
        %v1080 = vld [vmem:[%s7 + $0xc] sm:$0xf]
        %v1081 = vld [vmem:[%s7 + $0x10] sm:$0xf]
        %v1082 = vld [vmem:[%s7 + $0x14] sm:$0xf]
        %v1083 = vld [vmem:[%s7 + $0x18] sm:$0xf]
        %v1084 = vld [vmem:[%s7 + $0x1c] sm:$0xf]
        %v1085 = vld [vmem:[%s7 + $0x20] sm:$0xf]
        %v1086 = vld [vmem:[%s7 + $0x24] sm:$0xf]
        %v1087 = vld [vmem:[%s7 + $0x28] sm:$0xf]
        %v1088 = vld [vmem:[%s7 + $0x2c] sm:$0xf]
        %v1089 = vld [vmem:[%s7 + $0x30] sm:$0xf]
        %v1090 = vld [vmem:[%s7 + $0x34] sm:$0xf]
        %v1091 = vld [vmem:[%s7 + $0x38] sm:$0xf]
        %v1092 = vld [vmem:[%s7 + $0x3c] sm:$0xf]
        %1094 = vset.pattern.permute.xlu0 0
        %1095 = vperm.xlu0 %1094, %v1037
        %v1096 = vpop.permute.xlu0 %1095
        %1099 = vset.pattern.permute.xlu0 0
        %1100 = vperm.xlu0 %1099, %v1039
        %v1101 = vpop.permute.xlu0 %1100
        %1104 = vset.pattern.permute.xlu0 0
        %1105 = vperm.xlu0 %1104, %v1042
        %v1106 = vpop.permute.xlu0 %1105
        %1109 = vset.pattern.permute.xlu0 0
        %1110 = vperm.xlu0 %1109, %v1044
        %v1111 = vpop.permute.xlu0 %1110
        %1114 = vset.pattern.permute.xlu0 0
        %1115 = vperm.xlu0 %1114, %v1047
        %v1116 = vpop.permute.xlu0 %1115
        %1119 = vset.pattern.permute.xlu0 0
        %1120 = vperm.xlu0 %1119, %v1049
        %v1121 = vpop.permute.xlu0 %1120
        %1124 = vset.pattern.permute.xlu0 0
        %1125 = vperm.xlu0 %1124, %v1052
        %v1126 = vpop.permute.xlu0 %1125
        %1129 = vset.pattern.permute.xlu0 0
        %1130 = vperm.xlu0 %1129, %v1054
        %v1131 = vpop.permute.xlu0 %1130
        %1134 = vset.pattern.permute.xlu0 0
        %1135 = vperm.xlu0 %1134, %v1057
        %v1136 = vpop.permute.xlu0 %1135
        %1139 = vset.pattern.permute.xlu0 0
        %1140 = vperm.xlu0 %1139, %v1059
        %v1141 = vpop.permute.xlu0 %1140
        %1144 = vset.pattern.permute.xlu0 0
        %1145 = vperm.xlu0 %1144, %v1062
        %v1146 = vpop.permute.xlu0 %1145
        %1149 = vset.pattern.permute.xlu0 0
        %1150 = vperm.xlu0 %1149, %v1064
        %v1151 = vpop.permute.xlu0 %1150
        %1154 = vset.pattern.permute.xlu0 0
        %1155 = vperm.xlu0 %1154, %v1067
        %v1156 = vpop.permute.xlu0 %1155
        %1159 = vset.pattern.permute.xlu0 0
        %1160 = vperm.xlu0 %1159, %v1069
        %v1161 = vpop.permute.xlu0 %1160
        %1164 = vset.pattern.permute.xlu0 0
        %1165 = vperm.xlu0 %1164, %v1072
        %v1166 = vpop.permute.xlu0 %1165
        %1169 = vset.pattern.permute.xlu0 0
        %1170 = vperm.xlu0 %1169, %v1074
        %v1171 = vpop.permute.xlu0 %1170
        %v1189 = vunpack.c.l.b16 %v1077
        %v1190 = vunpack.c.l.b16 %v1078
        %v1191 = vunpack.c.l.b16 %v1079
        %v1192 = vunpack.c.l.b16 %v1080
        %v1193 = vunpack.c.l.b16 %v1081
        %v1194 = vunpack.c.l.b16 %v1082
        %v1195 = vunpack.c.l.b16 %v1083
        %v1196 = vunpack.c.l.b16 %v1084
        %v1197 = vunpack.c.l.b16 %v1085
        %v1198 = vunpack.c.l.b16 %v1086
        %v1199 = vunpack.c.l.b16 %v1087
        %v1200 = vunpack.c.l.b16 %v1088
        %v1201 = vunpack.c.l.b16 %v1089
        %v1202 = vunpack.c.l.b16 %v1090
        %v1203 = vunpack.c.l.b16 %v1091
        %v1204 = vunpack.c.l.b16 %v1092
        %v1205 = vpack.c.b16 %v1190, %v1189
        %v1206 = vpack.c.b16 %v1192, %v1191
        %v1207 = vpack.c.b16 %v1194, %v1193
        %v1208 = vpack.c.b16 %v1196, %v1195
        %v1209 = vpack.c.b16 %v1198, %v1197
        %v1210 = vpack.c.b16 %v1200, %v1199
        %v1211 = vpack.c.b16 %v1202, %v1201
        %v1212 = vpack.c.b16 %v1204, %v1203
        %vm1213 = vcmask 31744
        %v1215 = vsel %vm1213, %v1205, 0
        %v1218 = vsel %vm1213, %v1206, 0
        %v1221 = vsel %vm1213, %v1207, 0
        %v1224 = vsel %vm1213, %v1208, 0
        %v1227 = vsel %vm1213, %v1209, 0
        %v1230 = vsel %vm1213, %v1210, 0
        %v1233 = vsel %vm1213, %v1211, 0
        %v1236 = vsel %vm1213, %v1212, 0
        %vm1238 = vcmask 1041408
        %v1240 = vsel %vm1238, %v1076, 0
        %1242 = vmatpush.bf16.msra.mxu0 0
        %1243 = vmatpush.bf16.msra.mxu0 0
        %1244 = vmatpush.bf16.msra.mxu0 0
        %1245 = vmatpush.bf16.msra.mxu0 0
        %1246 = vmatpush.bf16.msra.mxu0 0
        %1247 = vmatpush.bf16.msra.mxu0 0
        %1248 = vmatpush.bf16.msra.mxu0 0
        %1249 = vmatpush.bf16.msra.mxu0 %v1240
        %1250 = vmatmul.bf16.gmra.mxu0 %v1215
        %v1251 = vpop.f32.mrf.mxu0
        %v1252 = vadd.f32 %v1096, %v1251
        %v1253 = vpop.f32.mrf.mxu0
        %v1254 = vadd.f32 %v1101, %v1253
        %1255 = vmatmul.bf16.gmra.mxu0 %v1218
        %v1256 = vpop.f32.mrf.mxu0
        %v1257 = vadd.f32 %v1106, %v1256
        %v1258 = vpop.f32.mrf.mxu0
        %v1259 = vadd.f32 %v1111, %v1258
        %1260 = vmatmul.bf16.gmra.mxu0 %v1221
        %v1261 = vpop.f32.mrf.mxu0
        %v1262 = vadd.f32 %v1116, %v1261
        %v1263 = vpop.f32.mrf.mxu0
        %v1264 = vadd.f32 %v1121, %v1263
        %1265 = vmatmul.bf16.gmra.mxu0 %v1224
        %v1266 = vpop.f32.mrf.mxu0
        %v1267 = vadd.f32 %v1126, %v1266
        %v1268 = vpop.f32.mrf.mxu0
        %v1269 = vadd.f32 %v1131, %v1268
        %1270 = vmatmul.bf16.gmra.mxu0 %v1227
        %v1271 = vpop.f32.mrf.mxu0
        %v1272 = vadd.f32 %v1136, %v1271
        %v1273 = vpop.f32.mrf.mxu0
        %v1274 = vadd.f32 %v1141, %v1273
        %1275 = vmatmul.bf16.gmra.mxu0 %v1230
        %v1276 = vpop.f32.mrf.mxu0
        %v1277 = vadd.f32 %v1146, %v1276
        %v1278 = vpop.f32.mrf.mxu0
        %v1279 = vadd.f32 %v1151, %v1278
        %1280 = vmatmul.bf16.gmra.mxu0 %v1233
        %v1281 = vpop.f32.mrf.mxu0
        %v1282 = vadd.f32 %v1156, %v1281
        %v1283 = vpop.f32.mrf.mxu0
        %v1284 = vadd.f32 %v1161, %v1283
        %1285 = vmatmul.bf16.gmra.mxu0 %v1236
        %v1286 = vpop.f32.mrf.mxu0
        %v1287 = vadd.f32 %v1166, %v1286
        %v1288 = vpop.f32.mrf.mxu0
        %v1289 = vadd.f32 %v1171, %v1288
        %1290 = vdwg.mxu0
        %v1291 = vmax.f32 %v1252, 0.0
        %v1292 = vmax.f32 %v1254, 0.0
        %v1293 = vmax.f32 %v1257, 0.0
        %v1294 = vmax.f32 %v1259, 0.0
        %v1295 = vmax.f32 %v1262, 0.0
        %v1296 = vmax.f32 %v1264, 0.0
        %v1297 = vmax.f32 %v1267, 0.0
        %v1298 = vmax.f32 %v1269, 0.0
        %v1299 = vmax.f32 %v1272, 0.0
        %v1300 = vmax.f32 %v1274, 0.0
        %v1301 = vmax.f32 %v1277, 0.0
        %v1302 = vmax.f32 %v1279, 0.0
        %v1303 = vmax.f32 %v1282, 0.0
        %v1304 = vmax.f32 %v1284, 0.0
        %v1305 = vmax.f32 %v1287, 0.0
        %v1306 = vmax.f32 %v1289, 0.0
        %v1307 = vpack.c.bf16 %v1292, %v1291
        %v1308 = vpack.c.bf16 %v1294, %v1293
        %v1309 = vpack.c.bf16 %v1296, %v1295
        %v1310 = vpack.c.bf16 %v1298, %v1297
        %v1311 = vpack.c.bf16 %v1300, %v1299
        %v1312 = vpack.c.bf16 %v1302, %v1301
        %v1313 = vpack.c.bf16 %v1304, %v1303
        %v1314 = vpack.c.bf16 %v1306, %v1305
        %v1315 = vld [vmem:[%s10] sm:$0xf]
        %v1316 = vld [vmem:[%s10 + $0x4] sm:$0xf]
        %v1317 = vld [vmem:[%s10 + $0x8] sm:$0xf]
        %v1318 = vld [vmem:[%s10 + $0xc] sm:$0xf]
        %v1319 = vld [vmem:[%s10 + $0x10] sm:$0xf]
        %v1320 = vld [vmem:[%s10 + $0x14] sm:$0xf]
        %v1321 = vld [vmem:[%s10 + $0x18] sm:$0xf]
        %v1322 = vld [vmem:[%s10 + $0x1c] sm:$0xf]
        %v1323 = vld [vmem:[%s10 + $0x20] sm:$0xf]
        %v1324 = vld [vmem:[%s10 + $0x24] sm:$0xf]
        %v1325 = vld [vmem:[%s10 + $0x28] sm:$0xf]
        %v1326 = vld [vmem:[%s10 + $0x2c] sm:$0xf]
        %v1327 = vld [vmem:[%s10 + $0x30] sm:$0xf]
        %v1328 = vld [vmem:[%s10 + $0x34] sm:$0xf]
        %v1329 = vld [vmem:[%s10 + $0x38] sm:$0xf]
        %v1330 = vld [vmem:[%s10 + $0x3c] sm:$0xf]
        %v1331 = vld [vmem:[%s11] sm:$0xff]
        %v1332 = vld [vmem:[%s11 + $0x8] sm:$0xff]
        %v1333 = vld [vmem:[%s11 + $0x10] sm:$0xff]
        %v1334 = vld [vmem:[%s11 + $0x18] sm:$0xff]
        %v1335 = vld [vmem:[%s11 + $0x20] sm:$0xff]
        %v1336 = vld [vmem:[%s11 + $0x28] sm:$0xff]
        %v1337 = vld [vmem:[%s11 + $0x30] sm:$0xff]
        %v1338 = vld [vmem:[%s11 + $0x38] sm:$0xff]
        %v1339 = vld [vmem:[%s11 + $0x40] sm:$0xff]
        %v1340 = vld [vmem:[%s11 + $0x48] sm:$0xff]
        %v1341 = vld [vmem:[%s11 + $0x50] sm:$0xff]
        %v1342 = vld [vmem:[%s11 + $0x58] sm:$0xff]
        %v1343 = vld [vmem:[%s11 + $0x60] sm:$0xff]
        %v1344 = vld [vmem:[%s11 + $0x68] sm:$0xff]
        %v1345 = vld [vmem:[%s11 + $0x70] sm:$0xff]
        %v1346 = vld [vmem:[%s11 + $0x78] sm:$0xff]
        %1348 = vset.pattern.permute.xlu0 0
        %1349 = vperm.xlu0 %1348, %v1331
        %v1350 = vpop.permute.xlu0 %1349
        %1353 = vset.pattern.permute.xlu0 0
        %1354 = vperm.xlu0 %1353, %v1332
        %v1355 = vpop.permute.xlu0 %1354
        %1358 = vset.pattern.permute.xlu0 0
        %1359 = vperm.xlu0 %1358, %v1333
        %v1360 = vpop.permute.xlu0 %1359
        %1363 = vset.pattern.permute.xlu0 0
        %1364 = vperm.xlu0 %1363, %v1334
        %v1365 = vpop.permute.xlu0 %1364
        %1368 = vset.pattern.permute.xlu0 0
        %1369 = vperm.xlu0 %1368, %v1335
        %v1370 = vpop.permute.xlu0 %1369
        %1373 = vset.pattern.permute.xlu0 0
        %1374 = vperm.xlu0 %1373, %v1336
        %v1375 = vpop.permute.xlu0 %1374
        %1378 = vset.pattern.permute.xlu0 0
        %1379 = vperm.xlu0 %1378, %v1337
        %v1380 = vpop.permute.xlu0 %1379
        %1383 = vset.pattern.permute.xlu0 0
        %1384 = vperm.xlu0 %1383, %v1338
        %v1385 = vpop.permute.xlu0 %1384
        %1388 = vset.pattern.permute.xlu0 0
        %1389 = vperm.xlu0 %1388, %v1339
        %v1390 = vpop.permute.xlu0 %1389
        %1393 = vset.pattern.permute.xlu0 0
        %1394 = vperm.xlu0 %1393, %v1340
        %v1395 = vpop.permute.xlu0 %1394
        %1398 = vset.pattern.permute.xlu0 0
        %1399 = vperm.xlu0 %1398, %v1341
        %v1400 = vpop.permute.xlu0 %1399
        %1403 = vset.pattern.permute.xlu0 0
        %1404 = vperm.xlu0 %1403, %v1342
        %v1405 = vpop.permute.xlu0 %1404
        %1408 = vset.pattern.permute.xlu0 0
        %1409 = vperm.xlu0 %1408, %v1343
        %v1410 = vpop.permute.xlu0 %1409
        %1413 = vset.pattern.permute.xlu0 0
        %1414 = vperm.xlu0 %1413, %v1344
        %v1415 = vpop.permute.xlu0 %1414
        %1418 = vset.pattern.permute.xlu0 0
        %1419 = vperm.xlu0 %1418, %v1345
        %v1420 = vpop.permute.xlu0 %1419
        %1423 = vset.pattern.permute.xlu0 0
        %1424 = vperm.xlu0 %1423, %v1346
        %v1425 = vpop.permute.xlu0 %1424
        %v1443 = vunpack.c.l.b16 %v1315
        %v1444 = vunpack.c.l.b16 %v1316
        %v1445 = vunpack.c.l.b16 %v1317
        %v1446 = vunpack.c.l.b16 %v1318
        %v1447 = vunpack.c.l.b16 %v1319
        %v1448 = vunpack.c.l.b16 %v1320
        %v1449 = vunpack.c.l.b16 %v1321
        %v1450 = vunpack.c.l.b16 %v1322
        %v1451 = vunpack.c.l.b16 %v1323
        %v1452 = vunpack.c.l.b16 %v1324
        %v1453 = vunpack.c.l.b16 %v1325
        %v1454 = vunpack.c.l.b16 %v1326
        %v1455 = vunpack.c.l.b16 %v1327
        %v1456 = vunpack.c.l.b16 %v1328
        %v1457 = vunpack.c.l.b16 %v1329
        %v1458 = vunpack.c.l.b16 %v1330
        %v1459 = vpack.c.b16 %v1444, %v1443
        %v1460 = vpack.c.b16 %v1446, %v1445
        %v1461 = vpack.c.b16 %v1448, %v1447
        %v1462 = vpack.c.b16 %v1450, %v1449
        %v1463 = vpack.c.b16 %v1452, %v1451
        %v1464 = vpack.c.b16 %v1454, %v1453
        %v1465 = vpack.c.b16 %v1456, %v1455
        %v1466 = vpack.c.b16 %v1458, %v1457
        %1475 = vmatpush.bf16.msra.mxu0 %v1314
        %1476 = vmatpush.bf16.msra.mxu0 %v1313
        %1477 = vmatpush.bf16.msra.mxu0 %v1312
        %1478 = vmatpush.bf16.msra.mxu0 %v1311
        %1479 = vmatpush.bf16.msra.mxu0 %v1310
        %1480 = vmatpush.bf16.msra.mxu0 %v1309
        %1481 = vmatpush.bf16.msra.mxu0 %v1308
        %1482 = vmatpush.bf16.msra.mxu0 %v1307
        %1483 = vmatmul.bf16.gmra.mxu0 %v1459
        %v1484 = vpop.f32.mrf.mxu0
        %v1485 = vadd.f32 %v1350, %v1484
        %v1486 = vpop.f32.mrf.mxu0
        %v1487 = vadd.f32 %v1355, %v1486
        %1488 = vmatmul.bf16.gmra.mxu0 %v1460
        %v1489 = vpop.f32.mrf.mxu0
        %v1490 = vadd.f32 %v1360, %v1489
        %v1491 = vpop.f32.mrf.mxu0
        %v1492 = vadd.f32 %v1365, %v1491
        %1493 = vmatmul.bf16.gmra.mxu0 %v1461
        %v1494 = vpop.f32.mrf.mxu0
        %v1495 = vadd.f32 %v1370, %v1494
        %v1496 = vpop.f32.mrf.mxu0
        %v1497 = vadd.f32 %v1375, %v1496
        %1498 = vmatmul.bf16.gmra.mxu0 %v1462
        %v1499 = vpop.f32.mrf.mxu0
        %v1500 = vadd.f32 %v1380, %v1499
        %v1501 = vpop.f32.mrf.mxu0
        %v1502 = vadd.f32 %v1385, %v1501
        %1503 = vmatmul.bf16.gmra.mxu0 %v1463
        %v1504 = vpop.f32.mrf.mxu0
        %v1505 = vadd.f32 %v1390, %v1504
        %v1506 = vpop.f32.mrf.mxu0
        %v1507 = vadd.f32 %v1395, %v1506
        %1508 = vmatmul.bf16.gmra.mxu0 %v1464
        %v1509 = vpop.f32.mrf.mxu0
        %v1510 = vadd.f32 %v1400, %v1509
        %v1511 = vpop.f32.mrf.mxu0
        %v1512 = vadd.f32 %v1405, %v1511
        %1513 = vmatmul.bf16.gmra.mxu0 %v1465
        %v1514 = vpop.f32.mrf.mxu0
        %v1515 = vadd.f32 %v1410, %v1514
        %v1516 = vpop.f32.mrf.mxu0
        %v1517 = vadd.f32 %v1415, %v1516
        %1518 = vmatmul.bf16.gmra.mxu0 %v1466
        %v1519 = vpop.f32.mrf.mxu0
        %v1520 = vadd.f32 %v1420, %v1519
        %v1521 = vpop.f32.mrf.mxu0
        %v1522 = vadd.f32 %v1425, %v1521
        %1523 = vdwg.mxu0
        %v1524 = vmax.f32 %v1485, 0.0
        %v1525 = vmax.f32 %v1487, 0.0
        %v1526 = vmax.f32 %v1490, 0.0
        %v1527 = vmax.f32 %v1492, 0.0
        %v1528 = vmax.f32 %v1495, 0.0
        %v1529 = vmax.f32 %v1497, 0.0
        %v1530 = vmax.f32 %v1500, 0.0
        %v1531 = vmax.f32 %v1502, 0.0
        %v1532 = vmax.f32 %v1505, 0.0
        %v1533 = vmax.f32 %v1507, 0.0
        %v1534 = vmax.f32 %v1510, 0.0
        %v1535 = vmax.f32 %v1512, 0.0
        %v1536 = vmax.f32 %v1515, 0.0
        %v1537 = vmax.f32 %v1517, 0.0
        %v1538 = vmax.f32 %v1520, 0.0
        %v1539 = vmax.f32 %v1522, 0.0
        %v1540 = vld [vmem:[%s12] sm:$0xff]
        %v1541 = vld [vmem:[%s12 + $0x8] sm:$0xff]
        %v1542 = vld [vmem:[%s12 + $0x10] sm:$0xff]
        %v1543 = vld [vmem:[%s12 + $0x18] sm:$0xff]
        %v1544 = vld [vmem:[%s12 + $0x20] sm:$0xff]
        %v1545 = vld [vmem:[%s12 + $0x28] sm:$0xff]
        %v1546 = vld [vmem:[%s12 + $0x30] sm:$0xff]
        %v1547 = vld [vmem:[%s12 + $0x38] sm:$0xff]
        %v1548 = vld [vmem:[%s12 + $0x40] sm:$0xff]
        %v1549 = vld [vmem:[%s12 + $0x48] sm:$0xff]
        %v1550 = vld [vmem:[%s12 + $0x50] sm:$0xff]
        %v1551 = vld [vmem:[%s12 + $0x58] sm:$0xff]
        %v1552 = vld [vmem:[%s12 + $0x60] sm:$0xff]
        %v1553 = vld [vmem:[%s12 + $0x68] sm:$0xff]
        %v1554 = vld [vmem:[%s12 + $0x70] sm:$0xff]
        %v1555 = vld [vmem:[%s12 + $0x78] sm:$0xff]
        %1557 = vset.pattern.permute.xlu0 0
        %1558 = vperm.xlu0 %1557, %v1540
        %v1559 = vpop.permute.xlu0 %1558
        %1562 = vset.pattern.permute.xlu0 0
        %1563 = vperm.xlu0 %1562, %v1541
        %v1564 = vpop.permute.xlu0 %1563
        %1567 = vset.pattern.permute.xlu0 0
        %1568 = vperm.xlu0 %1567, %v1542
        %v1569 = vpop.permute.xlu0 %1568
        %1572 = vset.pattern.permute.xlu0 0
        %1573 = vperm.xlu0 %1572, %v1543
        %v1574 = vpop.permute.xlu0 %1573
        %1577 = vset.pattern.permute.xlu0 0
        %1578 = vperm.xlu0 %1577, %v1544
        %v1579 = vpop.permute.xlu0 %1578
        %1582 = vset.pattern.permute.xlu0 0
        %1583 = vperm.xlu0 %1582, %v1545
        %v1584 = vpop.permute.xlu0 %1583
        %1587 = vset.pattern.permute.xlu0 0
        %1588 = vperm.xlu0 %1587, %v1546
        %v1589 = vpop.permute.xlu0 %1588
        %1592 = vset.pattern.permute.xlu0 0
        %1593 = vperm.xlu0 %1592, %v1547
        %v1594 = vpop.permute.xlu0 %1593
        %1597 = vset.pattern.permute.xlu0 0
        %1598 = vperm.xlu0 %1597, %v1548
        %v1599 = vpop.permute.xlu0 %1598
        %1602 = vset.pattern.permute.xlu0 0
        %1603 = vperm.xlu0 %1602, %v1549
        %v1604 = vpop.permute.xlu0 %1603
        %1607 = vset.pattern.permute.xlu0 0
        %1608 = vperm.xlu0 %1607, %v1550
        %v1609 = vpop.permute.xlu0 %1608
        %1612 = vset.pattern.permute.xlu0 0
        %1613 = vperm.xlu0 %1612, %v1551
        %v1614 = vpop.permute.xlu0 %1613
        %1617 = vset.pattern.permute.xlu0 0
        %1618 = vperm.xlu0 %1617, %v1552
        %v1619 = vpop.permute.xlu0 %1618
        %1622 = vset.pattern.permute.xlu0 0
        %1623 = vperm.xlu0 %1622, %v1553
        %v1624 = vpop.permute.xlu0 %1623
        %1627 = vset.pattern.permute.xlu0 0
        %1628 = vperm.xlu0 %1627, %v1554
        %v1629 = vpop.permute.xlu0 %1628
        %1632 = vset.pattern.permute.xlu0 0
        %1633 = vperm.xlu0 %1632, %v1555
        %v1634 = vpop.permute.xlu0 %1633
        %v1636 = vmul.f32 %v1524, %v1559
        %v1637 = vmul.f32 %v1525, %v1564
        %v1638 = vmul.f32 %v1526, %v1569
        %v1639 = vmul.f32 %v1527, %v1574
        %v1640 = vmul.f32 %v1528, %v1579
        %v1641 = vmul.f32 %v1529, %v1584
        %v1642 = vmul.f32 %v1530, %v1589
        %v1643 = vmul.f32 %v1531, %v1594
        %v1644 = vmul.f32 %v1532, %v1599
        %v1645 = vmul.f32 %v1533, %v1604
        %v1646 = vmul.f32 %v1534, %v1609
        %v1647 = vmul.f32 %v1535, %v1614
        %v1648 = vmul.f32 %v1536, %v1619
        %v1649 = vmul.f32 %v1537, %v1624
        %v1650 = vmul.f32 %v1538, %v1629
        %v1651 = vmul.f32 %v1539, %v1634
        %vm1652 = vcmask 523264
        %v1653 = vsel %vm1652, %v1636, 0.0
        %v1654 = vsel %vm1652, %v1637, 0.0
        %v1655 = vadd.f32 %v1653, %v1654
        %v1656 = vsel %vm1652, %v1638, 0.0
        %v1657 = vadd.f32 %v1655, %v1656
        %v1658 = vsel %vm1652, %v1639, 0.0
        %v1659 = vadd.f32 %v1657, %v1658
        %v1660 = vsel %vm1652, %v1640, 0.0
        %v1661 = vadd.f32 %v1659, %v1660
        %v1662 = vsel %vm1652, %v1641, 0.0
        %v1663 = vadd.f32 %v1661, %v1662
        %v1664 = vsel %vm1652, %v1642, 0.0
        %v1665 = vadd.f32 %v1663, %v1664
        %v1666 = vsel %vm1652, %v1643, 0.0
        %v1667 = vadd.f32 %v1665, %v1666
        %v1668 = vsel %vm1652, %v1644, 0.0
        %v1669 = vadd.f32 %v1667, %v1668
        %v1670 = vsel %vm1652, %v1645, 0.0
        %v1671 = vadd.f32 %v1669, %v1670
        %v1672 = vsel %vm1652, %v1646, 0.0
        %v1673 = vadd.f32 %v1671, %v1672
        %v1674 = vsel %vm1652, %v1647, 0.0
        %v1675 = vadd.f32 %v1673, %v1674
        %v1676 = vsel %vm1652, %v1648, 0.0
        %v1677 = vadd.f32 %v1675, %v1676
        %v1678 = vsel %vm1652, %v1649, 0.0
        %v1679 = vadd.f32 %v1677, %v1678
        %v1680 = vsel %vm1652, %v1650, 0.0
        %v1681 = vadd.f32 %v1679, %v1680
        %v1682 = vsel %vm1652, %v1651, 0.0
        %v1683 = vadd.f32 %v1681, %v1682
        %v1684 = vrot.slane %v1683, 4
        %v1685 = vadd.f32 %v1683, %v1684
        %v1686 = vrot.slane %v1685, 2
        %v1687 = vadd.f32 %v1685, %v1686
        %v1688 = vrot.slane %v1687, 1
        %v1689 = vadd.f32 %v1687, %v1688
        %v1690 = vld [vmem:[#allocation2] sm:$0x1]
        %1692 = vset.pattern.permute.xlu0 0
        %1693 = vperm.xlu0 %1692, %v1690
        %v1694 = vpop.permute.xlu0 %1693
        %v1696 = vperm.slane %v1694, 0
        %v1697 = vadd.f32 %v1689, %v1696
        %v1698 = vld [vmem:[%s887] sm:$0x3]
        %v1700 = vsel %vm1238, %v1698, 0
        %1702 = vmatpush.bf16.msra.mxu0 0
        %1703 = vmatpush.bf16.msra.mxu0 0
        %1704 = vmatpush.bf16.msra.mxu0 0
        %1705 = vmatpush.bf16.msra.mxu0 0
        %1706 = vmatpush.bf16.msra.mxu0 0
        %1707 = vmatpush.bf16.msra.mxu0 0
        %1708 = vmatpush.bf16.msra.mxu0 0
        %1709 = vmatpush.bf16.msra.mxu0 %v1700
        %1710 = vmatmul.bf16.gmra.mxu0 %v1215
        %v1711 = vpop.f32.mrf.mxu0
        %v1712 = vadd.f32 %v1096, %v1711
        %v1713 = vpop.f32.mrf.mxu0
        %v1714 = vadd.f32 %v1101, %v1713
        %1715 = vmatmul.bf16.gmra.mxu0 %v1218
        %v1716 = vpop.f32.mrf.mxu0
        %v1717 = vadd.f32 %v1106, %v1716
        %v1718 = vpop.f32.mrf.mxu0
        %v1719 = vadd.f32 %v1111, %v1718
        %1720 = vmatmul.bf16.gmra.mxu0 %v1221
        %v1721 = vpop.f32.mrf.mxu0
        %v1722 = vadd.f32 %v1116, %v1721
        %v1723 = vpop.f32.mrf.mxu0
        %v1724 = vadd.f32 %v1121, %v1723
        %1725 = vmatmul.bf16.gmra.mxu0 %v1224
        %v1726 = vpop.f32.mrf.mxu0
        %v1727 = vadd.f32 %v1126, %v1726
        %v1728 = vpop.f32.mrf.mxu0
        %v1729 = vadd.f32 %v1131, %v1728
        %1730 = vmatmul.bf16.gmra.mxu0 %v1227
        %v1731 = vpop.f32.mrf.mxu0
        %v1732 = vadd.f32 %v1136, %v1731
        %v1733 = vpop.f32.mrf.mxu0
        %v1734 = vadd.f32 %v1141, %v1733
        %1735 = vmatmul.bf16.gmra.mxu0 %v1230
        %v1736 = vpop.f32.mrf.mxu0
        %v1737 = vadd.f32 %v1146, %v1736
        %v1738 = vpop.f32.mrf.mxu0
        %v1739 = vadd.f32 %v1151, %v1738
        %1740 = vmatmul.bf16.gmra.mxu0 %v1233
        %v1741 = vpop.f32.mrf.mxu0
        %v1742 = vadd.f32 %v1156, %v1741
        %v1743 = vpop.f32.mrf.mxu0
        %v1744 = vadd.f32 %v1161, %v1743
        %1745 = vmatmul.bf16.gmra.mxu0 %v1236
        %v1746 = vpop.f32.mrf.mxu0
        %v1747 = vadd.f32 %v1166, %v1746
        %v1748 = vpop.f32.mrf.mxu0
        %v1749 = vadd.f32 %v1171, %v1748
        %1750 = vdwg.mxu0
        %v1751 = vmax.f32 %v1712, 0.0
        %v1752 = vmax.f32 %v1714, 0.0
        %v1753 = vmax.f32 %v1717, 0.0
        %v1754 = vmax.f32 %v1719, 0.0
        %v1755 = vmax.f32 %v1722, 0.0
        %v1756 = vmax.f32 %v1724, 0.0
        %v1757 = vmax.f32 %v1727, 0.0
        %v1758 = vmax.f32 %v1729, 0.0
        %v1759 = vmax.f32 %v1732, 0.0
        %v1760 = vmax.f32 %v1734, 0.0
        %v1761 = vmax.f32 %v1737, 0.0
        %v1762 = vmax.f32 %v1739, 0.0
        %v1763 = vmax.f32 %v1742, 0.0
        %v1764 = vmax.f32 %v1744, 0.0
        %v1765 = vmax.f32 %v1747, 0.0
        %v1766 = vmax.f32 %v1749, 0.0
        %v1767 = vpack.c.bf16 %v1752, %v1751
        %v1768 = vpack.c.bf16 %v1754, %v1753
        %v1769 = vpack.c.bf16 %v1756, %v1755
        %v1770 = vpack.c.bf16 %v1758, %v1757
        %v1771 = vpack.c.bf16 %v1760, %v1759
        %v1772 = vpack.c.bf16 %v1762, %v1761
        %v1773 = vpack.c.bf16 %v1764, %v1763
        %v1774 = vpack.c.bf16 %v1766, %v1765
        %1775 = vmatpush.bf16.msra.mxu0 %v1774
        %1776 = vmatpush.bf16.msra.mxu0 %v1773
        %1777 = vmatpush.bf16.msra.mxu0 %v1772
        %1778 = vmatpush.bf16.msra.mxu0 %v1771
        %1779 = vmatpush.bf16.msra.mxu0 %v1770
        %1780 = vmatpush.bf16.msra.mxu0 %v1769
        %1781 = vmatpush.bf16.msra.mxu0 %v1768
        %1782 = vmatpush.bf16.msra.mxu0 %v1767
        %1783 = vmatmul.bf16.gmra.mxu0 %v1459
        %v1784 = vpop.f32.mrf.mxu0
        %v1785 = vadd.f32 %v1350, %v1784
        %v1786 = vpop.f32.mrf.mxu0
        %v1787 = vadd.f32 %v1355, %v1786
        %1788 = vmatmul.bf16.gmra.mxu0 %v1460
        %v1789 = vpop.f32.mrf.mxu0
        %v1790 = vadd.f32 %v1360, %v1789
        %v1791 = vpop.f32.mrf.mxu0
        %v1792 = vadd.f32 %v1365, %v1791
        %1793 = vmatmul.bf16.gmra.mxu0 %v1461
        %v1794 = vpop.f32.mrf.mxu0
        %v1795 = vadd.f32 %v1370, %v1794
        %v1796 = vpop.f32.mrf.mxu0
        %v1797 = vadd.f32 %v1375, %v1796
        %1798 = vmatmul.bf16.gmra.mxu0 %v1462
        %v1799 = vpop.f32.mrf.mxu0
        %v1800 = vadd.f32 %v1380, %v1799
        %v1801 = vpop.f32.mrf.mxu0
        %v1802 = vadd.f32 %v1385, %v1801
        %1803 = vmatmul.bf16.gmra.mxu0 %v1463
        %v1804 = vpop.f32.mrf.mxu0
        %v1805 = vadd.f32 %v1390, %v1804
        %v1806 = vpop.f32.mrf.mxu0
        %v1807 = vadd.f32 %v1395, %v1806
        %1808 = vmatmul.bf16.gmra.mxu0 %v1464
        %v1809 = vpop.f32.mrf.mxu0
        %v1810 = vadd.f32 %v1400, %v1809
        %v1811 = vpop.f32.mrf.mxu0
        %v1812 = vadd.f32 %v1405, %v1811
        %1813 = vmatmul.bf16.gmra.mxu0 %v1465
        %v1814 = vpop.f32.mrf.mxu0
        %v1815 = vadd.f32 %v1410, %v1814
        %v1816 = vpop.f32.mrf.mxu0
        %v1817 = vadd.f32 %v1415, %v1816
        %1818 = vmatmul.bf16.gmra.mxu0 %v1466
        %v1819 = vpop.f32.mrf.mxu0
        %v1820 = vadd.f32 %v1420, %v1819
        %v1821 = vpop.f32.mrf.mxu0
        %v1822 = vadd.f32 %v1425, %v1821
        %1823 = vdwg.mxu0
        %v1824 = vmax.f32 %v1785, 0.0
        %v1825 = vmax.f32 %v1787, 0.0
        %v1826 = vmax.f32 %v1790, 0.0
        %v1827 = vmax.f32 %v1792, 0.0
        %v1828 = vmax.f32 %v1795, 0.0
        %v1829 = vmax.f32 %v1797, 0.0
        %v1830 = vmax.f32 %v1800, 0.0
        %v1831 = vmax.f32 %v1802, 0.0
        %v1832 = vmax.f32 %v1805, 0.0
        %v1833 = vmax.f32 %v1807, 0.0
        %v1834 = vmax.f32 %v1810, 0.0
        %v1835 = vmax.f32 %v1812, 0.0
        %v1836 = vmax.f32 %v1815, 0.0
        %v1837 = vmax.f32 %v1817, 0.0
        %v1838 = vmax.f32 %v1820, 0.0
        %v1839 = vmax.f32 %v1822, 0.0
        %v1840 = vmul.f32 %v1824, %v1559
        %v1841 = vmul.f32 %v1825, %v1564
        %v1842 = vmul.f32 %v1826, %v1569
        %v1843 = vmul.f32 %v1827, %v1574
        %v1844 = vmul.f32 %v1828, %v1579
        %v1845 = vmul.f32 %v1829, %v1584
        %v1846 = vmul.f32 %v1830, %v1589
        %v1847 = vmul.f32 %v1831, %v1594
        %v1848 = vmul.f32 %v1832, %v1599
        %v1849 = vmul.f32 %v1833, %v1604
        %v1850 = vmul.f32 %v1834, %v1609
        %v1851 = vmul.f32 %v1835, %v1614
        %v1852 = vmul.f32 %v1836, %v1619
        %v1853 = vmul.f32 %v1837, %v1624
        %v1854 = vmul.f32 %v1838, %v1629
        %v1855 = vmul.f32 %v1839, %v1634
        %v1856 = vsel %vm1652, %v1840, 0.0
        %v1857 = vsel %vm1652, %v1841, 0.0
        %v1858 = vadd.f32 %v1856, %v1857
        %v1859 = vsel %vm1652, %v1842, 0.0
        %v1860 = vadd.f32 %v1858, %v1859
        %v1861 = vsel %vm1652, %v1843, 0.0
        %v1862 = vadd.f32 %v1860, %v1861
        %v1863 = vsel %vm1652, %v1844, 0.0
        %v1864 = vadd.f32 %v1862, %v1863
        %v1865 = vsel %vm1652, %v1845, 0.0
        %v1866 = vadd.f32 %v1864, %v1865
        %v1867 = vsel %vm1652, %v1846, 0.0
        %v1868 = vadd.f32 %v1866, %v1867
        %v1869 = vsel %vm1652, %v1847, 0.0
        %v1870 = vadd.f32 %v1868, %v1869
        %v1871 = vsel %vm1652, %v1848, 0.0
        %v1872 = vadd.f32 %v1870, %v1871
        %v1873 = vsel %vm1652, %v1849, 0.0
        %v1874 = vadd.f32 %v1872, %v1873
        %v1875 = vsel %vm1652, %v1850, 0.0
        %v1876 = vadd.f32 %v1874, %v1875
        %v1877 = vsel %vm1652, %v1851, 0.0
        %v1878 = vadd.f32 %v1876, %v1877
        %v1879 = vsel %vm1652, %v1852, 0.0
        %v1880 = vadd.f32 %v1878, %v1879
        %v1881 = vsel %vm1652, %v1853, 0.0
        %v1882 = vadd.f32 %v1880, %v1881
        %v1883 = vsel %vm1652, %v1854, 0.0
        %v1884 = vadd.f32 %v1882, %v1883
        %v1885 = vsel %vm1652, %v1855, 0.0
        %v1886 = vadd.f32 %v1884, %v1885
        %v1887 = vrot.slane %v1886, 4
        %v1888 = vadd.f32 %v1886, %v1887
        %v1889 = vrot.slane %v1888, 2
        %v1890 = vadd.f32 %v1888, %v1889
        %v1891 = vrot.slane %v1890, 1
        %v1892 = vadd.f32 %v1890, %v1891
        %v1893 = vadd.f32 %v1892, %v1696
        %v1894 = vmax.f32 %v1893, 0.0
        %v1895 = vand.u32 2147483647, %v1893
        %v1896 = vsub.f32 0.0, %v1895
        %v1897 = vmul.f32 %v1896, 1.442695
        %v1898 = vpow.pop %v1897
        %v1899 = vadd.f32 %v1898, 1.0
        %v1900 = vlog2.pop %v1899
        %v1901 = vmul.f32 %v1900, 0.6931472
        %v1902 = vadd.f32 %v1894, %v1901
        %v1903 = vsel %vm1652, %v1902, 0.0
        %1904 = vadd.xlane.f32.xlu0 %v1903
        %v1905 = vpop.xlane.xlu0 %1904
        %v1906 = vsub.f32 0.0, %v1697
        %v1907 = vmax.f32 %v1906, 0.0
        %v1908 = vand.u32 2147483647, %v1906
        %v1909 = vsub.f32 0.0, %v1908
        %v1910 = vmul.f32 %v1909, 1.442695
        %v1911 = vpow.pop %v1910
        %v1912 = vadd.f32 %v1911, 1.0
        %v1913 = vlog2.pop %v1912
        %v1914 = vmul.f32 %v1913, 0.6931472
        %v1915 = vadd.f32 %v1907, %v1914
        %v1916 = vsel %vm1652, %v1915, 0.0
        %1917 = vadd.xlane.f32.xlu0 %v1916
        %v1918 = vpop.xlane.xlu0 %1917
        %v1919 = vadd.f32 %v1905, %v1918
        %v1920 = vmul.f32 %v1919, 0.0078125
        %v1921 = vld [vmem:[%s898] sm:$0x1]
        %v1922 = vld [vmem:[%s14] sm:$0xf]
        %v1923 = vld [vmem:[%s14 + $0x4] sm:$0xf]
        %v1924 = vld [vmem:[%s14 + $0x8] sm:$0xf]
        %v1925 = vld [vmem:[%s14 + $0xc] sm:$0xf]
        %v1926 = vld [vmem:[%s16] sm:$0x1]
        %v1931 = vunpack.c.l.b16 %v1922
        %v1932 = vunpack.c.l.b16 %v1923
        %v1933 = vunpack.c.l.b16 %v1924
        %v1934 = vunpack.c.l.b16 %v1925
        %v1935 = vpack.c.b16 %v1932, %v1931
        %v1936 = vpack.c.b16 %v1934, %v1933
        %v1940 = vsel %vm1002, %v1921, 0
        %1942 = vmatpush.bf16.msra.mxu0 0
        %1943 = vmatpush.bf16.msra.mxu0 0
        %1944 = vmatpush.bf16.msra.mxu0 0
        %1945 = vmatpush.bf16.msra.mxu0 0
        %1946 = vmatpush.bf16.msra.mxu0 0
        %1947 = vmatpush.bf16.msra.mxu0 0
        %1948 = vmatpush.bf16.msra.mxu0 %v1936
        %1949 = vmatpush.bf16.msra.mxu0 %v1935
        %1950 = vmatmul.bf16.gmra.mxu0 %v1940
        %v1951 = vpop.f32.mrf.mxu0
        %v1952 = vadd.f32 %v1926, %v1951
        %v1953 = vpop.f32.mrf.mxu0
        %1954 = vdwg.mxu0
        %v1955 = vld [vmem:[%s891] sm:$0x3]
        %v1956 = vld [vmem:[%s15] sm:$0xf]
        %v1957 = vld [vmem:[%s15 + $0x4] sm:$0xf]
        %v1958 = vld [vmem:[%s15 + $0x8] sm:$0xf]
        %v1959 = vld [vmem:[%s15 + $0xc] sm:$0xf]
        %v1960 = vld [vmem:[%s15 + $0x10] sm:$0xf]
        %v1961 = vld [vmem:[%s15 + $0x14] sm:$0xf]
        %v1962 = vld [vmem:[%s15 + $0x18] sm:$0xf]
        %v1963 = vld [vmem:[%s15 + $0x1c] sm:$0xf]
        %v1964 = vld [vmem:[%s15 + $0x20] sm:$0xf]
        %v1965 = vld [vmem:[%s15 + $0x24] sm:$0xf]
        %v1966 = vld [vmem:[%s15 + $0x28] sm:$0xf]
        %v1967 = vld [vmem:[%s15 + $0x2c] sm:$0xf]
        %v1968 = vld [vmem:[%s15 + $0x30] sm:$0xf]
        %v1969 = vld [vmem:[%s15 + $0x34] sm:$0xf]
        %v1970 = vld [vmem:[%s15 + $0x38] sm:$0xf]
        %v1971 = vld [vmem:[%s15 + $0x3c] sm:$0xf]
        %v1972 = vld [vmem:[%s15 + $0x40] sm:$0xf]
        %v1973 = vld [vmem:[%s15 + $0x44] sm:$0xf]
        %v1974 = vld [vmem:[%s15 + $0x48] sm:$0xf]
        %v1975 = vld [vmem:[%s15 + $0x4c] sm:$0xf]
        %v1976 = vld [vmem:[%s15 + $0x50] sm:$0xf]
        %v1977 = vld [vmem:[%s15 + $0x54] sm:$0xf]
        %v1978 = vld [vmem:[%s15 + $0x58] sm:$0xf]
        %v1979 = vld [vmem:[%s15 + $0x5c] sm:$0xf]
        %v1980 = vld [vmem:[%s15 + $0x60] sm:$0xf]
        %v1981 = vld [vmem:[%s15 + $0x64] sm:$0xf]
        %v1982 = vld [vmem:[%s15 + $0x68] sm:$0xf]
        %v1983 = vld [vmem:[%s15 + $0x6c] sm:$0xf]
        %v1984 = vld [vmem:[%s15 + $0x70] sm:$0xf]
        %v1985 = vld [vmem:[%s15 + $0x74] sm:$0xf]
        %v1986 = vld [vmem:[%s15 + $0x78] sm:$0xf]
        %v1987 = vld [vmem:[%s15 + $0x7c] sm:$0xf]
        %1989 = vst [vmem:[#allocation1] ss:$9 sm:$0xff] %v1955
        %v1990 = vld [vmem:[#allocation1] sm:$0xff]
        %v1991 = vld [vmem:[#allocation1 + $0x9] sm:$0xff]
        %v2026 = vunpack.c.l.b16 %v1956
        %v2027 = vunpack.c.l.b16 %v1957
        %v2028 = vunpack.c.l.b16 %v1958
        %v2029 = vunpack.c.l.b16 %v1959
        %v2030 = vunpack.c.l.b16 %v1960
        %v2031 = vunpack.c.l.b16 %v1961
        %v2032 = vunpack.c.l.b16 %v1962
        %v2033 = vunpack.c.l.b16 %v1963
        %v2034 = vunpack.c.l.b16 %v1964
        %v2035 = vunpack.c.l.b16 %v1965
        %v2036 = vunpack.c.l.b16 %v1966
        %v2037 = vunpack.c.l.b16 %v1967
        %v2038 = vunpack.c.l.b16 %v1968
        %v2039 = vunpack.c.l.b16 %v1969
        %v2040 = vunpack.c.l.b16 %v1970
        %v2041 = vunpack.c.l.b16 %v1971
        %v2042 = vunpack.c.l.b16 %v1972
        %v2043 = vunpack.c.l.b16 %v1973
        %v2044 = vunpack.c.l.b16 %v1974
        %v2045 = vunpack.c.l.b16 %v1975
        %v2046 = vunpack.c.l.b16 %v1976
        %v2047 = vunpack.c.l.b16 %v1977
        %v2048 = vunpack.c.l.b16 %v1978
        %v2049 = vunpack.c.l.b16 %v1979
        %v2050 = vunpack.c.l.b16 %v1980
        %v2051 = vunpack.c.l.b16 %v1981
        %v2052 = vunpack.c.l.b16 %v1982
        %v2053 = vunpack.c.l.b16 %v1983
        %v2054 = vunpack.c.l.b16 %v1984
        %v2055 = vunpack.c.l.b16 %v1985
        %v2056 = vunpack.c.l.b16 %v1986
        %v2057 = vunpack.c.l.b16 %v1987
        %v2058 = vpack.c.b16 %v2027, %v2026
        %v2059 = vpack.c.b16 %v2029, %v2028
        %v2060 = vpack.c.b16 %v2031, %v2030
        %v2061 = vpack.c.b16 %v2033, %v2032
        %v2062 = vpack.c.b16 %v2035, %v2034
        %v2063 = vpack.c.b16 %v2037, %v2036
        %v2064 = vpack.c.b16 %v2039, %v2038
        %v2065 = vpack.c.b16 %v2041, %v2040
        %v2066 = vpack.c.b16 %v2043, %v2042
        %v2067 = vpack.c.b16 %v2045, %v2044
        %v2068 = vpack.c.b16 %v2047, %v2046
        %v2069 = vpack.c.b16 %v2049, %v2048
        %v2070 = vpack.c.b16 %v2051, %v2050
        %v2071 = vpack.c.b16 %v2053, %v2052
        %v2072 = vpack.c.b16 %v2055, %v2054
        %v2073 = vpack.c.b16 %v2057, %v2056
        %2090 = vmatpush.bf16.msra.mxu0 %v2065
        %2091 = vmatpush.bf16.msra.mxu0 %v2064
        %2092 = vmatpush.bf16.msra.mxu0 %v2063
        %2093 = vmatpush.bf16.msra.mxu0 %v2062
        %2094 = vmatpush.bf16.msra.mxu0 %v2061
        %2095 = vmatpush.bf16.msra.mxu0 %v2060
        %2096 = vmatpush.bf16.msra.mxu0 %v2059
        %2097 = vmatpush.bf16.msra.mxu0 %v2058
        %2098 = vmatmul.bf16.gmra.mxu0 %v1990
        %v2099 = vpop.f32.mrf.mxu0
        %v2100 = vadd.f32 %v1952, %v2099
        %v2101 = vpop.f32.mrf.mxu0
        %2102 = vdwg.mxu0
        %2103 = vmatpush.bf16.msra.mxu0 %v2073
        %2104 = vmatpush.bf16.msra.mxu0 %v2072
        %2105 = vmatpush.bf16.msra.mxu0 %v2071
        %2106 = vmatpush.bf16.msra.mxu0 %v2070
        %2107 = vmatpush.bf16.msra.mxu0 %v2069
        %2108 = vmatpush.bf16.msra.mxu0 %v2068
        %2109 = vmatpush.bf16.msra.mxu0 %v2067
        %2110 = vmatpush.bf16.msra.mxu0 %v2066
        %2111 = vmatmul.bf16.gmra.mxu0 %v1991
        %v2112 = vpop.f32.mrf.mxu0
        %v2113 = vadd.f32 %v2100, %v2112
        %v2114 = vpop.f32.mrf.mxu0
        %2115 = vdwg.mxu0
        %v2116 = vmax.f32 %v2113, 0.0
        %v2117 = vpack.c.bf16 %v2116, %v2116
        %v2118 = vld [vmem:[%s17] sm:$0xf]
        %v2119 = vld [vmem:[%s17 + $0x4] sm:$0xf]
        %v2120 = vld [vmem:[%s17 + $0x8] sm:$0xf]
        %v2121 = vld [vmem:[%s17 + $0xc] sm:$0xf]
        %v2122 = vld [vmem:[%s17 + $0x10] sm:$0xf]
        %v2123 = vld [vmem:[%s17 + $0x14] sm:$0xf]
        %v2124 = vld [vmem:[%s17 + $0x18] sm:$0xf]
        %v2125 = vld [vmem:[%s17 + $0x1c] sm:$0xf]
        %v2126 = vld [vmem:[%s17 + $0x20] sm:$0xf]
        %v2127 = vld [vmem:[%s17 + $0x24] sm:$0xf]
        %v2128 = vld [vmem:[%s17 + $0x28] sm:$0xf]
        %v2129 = vld [vmem:[%s17 + $0x2c] sm:$0xf]
        %v2130 = vld [vmem:[%s17 + $0x30] sm:$0xf]
        %v2131 = vld [vmem:[%s17 + $0x34] sm:$0xf]
        %v2132 = vld [vmem:[%s17 + $0x38] sm:$0xf]
        %v2133 = vld [vmem:[%s17 + $0x3c] sm:$0xf]
        %v2134 = vld [vmem:[%s18] sm:$0x1]
        %v2151 = vunpack.c.l.b16 %v2118
        %v2152 = vunpack.c.l.b16 %v2119
        %v2153 = vunpack.c.l.b16 %v2120
        %v2154 = vunpack.c.l.b16 %v2121
        %v2155 = vunpack.c.l.b16 %v2122
        %v2156 = vunpack.c.l.b16 %v2123
        %v2157 = vunpack.c.l.b16 %v2124
        %v2158 = vunpack.c.l.b16 %v2125
        %v2159 = vunpack.c.l.b16 %v2126
        %v2160 = vunpack.c.l.b16 %v2127
        %v2161 = vunpack.c.l.b16 %v2128
        %v2162 = vunpack.c.l.b16 %v2129
        %v2163 = vunpack.c.l.b16 %v2130
        %v2164 = vunpack.c.l.b16 %v2131
        %v2165 = vunpack.c.l.b16 %v2132
        %v2166 = vunpack.c.l.b16 %v2133
        %v2167 = vpack.c.b16 %v2152, %v2151
        %v2168 = vpack.c.b16 %v2154, %v2153
        %v2169 = vpack.c.b16 %v2156, %v2155
        %v2170 = vpack.c.b16 %v2158, %v2157
        %v2171 = vpack.c.b16 %v2160, %v2159
        %v2172 = vpack.c.b16 %v2162, %v2161
        %v2173 = vpack.c.b16 %v2164, %v2163
        %v2174 = vpack.c.b16 %v2166, %v2165
        %2183 = vmatpush.bf16.msra.mxu0 %v2174
        %2184 = vmatpush.bf16.msra.mxu0 %v2173
        %2185 = vmatpush.bf16.msra.mxu0 %v2172
        %2186 = vmatpush.bf16.msra.mxu0 %v2171
        %2187 = vmatpush.bf16.msra.mxu0 %v2170
        %2188 = vmatpush.bf16.msra.mxu0 %v2169
        %2189 = vmatpush.bf16.msra.mxu0 %v2168
        %2190 = vmatpush.bf16.msra.mxu0 %v2167
        %2191 = vmatmul.bf16.gmra.mxu0 %v2117
        %v2192 = vpop.f32.mrf.mxu0
        %v2193 = vadd.f32 %v2134, %v2192
        %v2194 = vpop.f32.mrf.mxu0
        %2195 = vdwg.mxu0
        %v2196 = vmax.f32 %v2193, 0.0
        %v2197 = vld [vmem:[%s19] sm:$0x1]
        %v2198 = vmul.f32 %v2196, %v2197
        %vm2199 = vcmask 1040384
        %v2200 = vsel %vm2199, %v2198, 0.0
        %2201 = vadd.xlane.f32.xlu0 %v2200
        %v2202 = vpop.xlane.xlu0 %2201
        %v2203 = vld [vmem:[#allocation3] sm:$0x1]
        %v2204 = vadd.f32 %v2202, %v2203
        %v2205 = vld [vmem:[%s895] sm:$0x3]
        %2207 = vst [vmem:[#allocation1] ss:$9 sm:$0xff] %v2205
        %v2208 = vld [vmem:[#allocation1] sm:$0xff]
        %v2209 = vld [vmem:[#allocation1 + $0x9] sm:$0xff]
        %2212 = vmatpush.bf16.msra.mxu0 %v2065
        %2213 = vmatpush.bf16.msra.mxu0 %v2064
        %2214 = vmatpush.bf16.msra.mxu0 %v2063
        %2215 = vmatpush.bf16.msra.mxu0 %v2062
        %2216 = vmatpush.bf16.msra.mxu0 %v2061
        %2217 = vmatpush.bf16.msra.mxu0 %v2060
        %2218 = vmatpush.bf16.msra.mxu0 %v2059
        %2219 = vmatpush.bf16.msra.mxu0 %v2058
        %2220 = vmatmul.bf16.gmra.mxu0 %v2208
        %v2221 = vpop.f32.mrf.mxu0
        %v2222 = vadd.f32 %v1952, %v2221
        %v2223 = vpop.f32.mrf.mxu0
        %2224 = vdwg.mxu0
        %2225 = vmatpush.bf16.msra.mxu0 %v2073
        %2226 = vmatpush.bf16.msra.mxu0 %v2072
        %2227 = vmatpush.bf16.msra.mxu0 %v2071
        %2228 = vmatpush.bf16.msra.mxu0 %v2070
        %2229 = vmatpush.bf16.msra.mxu0 %v2069
        %2230 = vmatpush.bf16.msra.mxu0 %v2068
        %2231 = vmatpush.bf16.msra.mxu0 %v2067
        %2232 = vmatpush.bf16.msra.mxu0 %v2066
        %2233 = vmatmul.bf16.gmra.mxu0 %v2209
        %v2234 = vpop.f32.mrf.mxu0
        %v2235 = vadd.f32 %v2222, %v2234
        %v2236 = vpop.f32.mrf.mxu0
        %2237 = vdwg.mxu0
        %v2238 = vmax.f32 %v2235, 0.0
        %v2239 = vpack.c.bf16 %v2238, %v2238
        %2240 = vmatpush.bf16.msra.mxu0 %v2174
        %2241 = vmatpush.bf16.msra.mxu0 %v2173
        %2242 = vmatpush.bf16.msra.mxu0 %v2172
        %2243 = vmatpush.bf16.msra.mxu0 %v2171
        %2244 = vmatpush.bf16.msra.mxu0 %v2170
        %2245 = vmatpush.bf16.msra.mxu0 %v2169
        %2246 = vmatpush.bf16.msra.mxu0 %v2168
        %2247 = vmatpush.bf16.msra.mxu0 %v2167
        %2248 = vmatmul.bf16.gmra.mxu0 %v2239
        %v2249 = vpop.f32.mrf.mxu0
        %v2250 = vadd.f32 %v2134, %v2249
        %v2251 = vpop.f32.mrf.mxu0
        %2252 = vdwg.mxu0
        %v2253 = vmax.f32 %v2250, 0.0
        %v2254 = vmul.f32 %v2253, %v2197
        %v2255 = vsel %vm2199, %v2254, 0.0
        %2256 = vadd.xlane.f32.xlu0 %v2255
        %v2257 = vpop.xlane.xlu0 %2256
        %v2258 = vadd.f32 %v2257, %v2203
        %v2259 = vmax.f32 %v2258, 0.0
        %v2260 = vand.u32 2147483647, %v2258
        %v2261 = vsub.f32 0.0, %v2260
        %v2262 = vmul.f32 %v2261, 1.442695
        %v2263 = vpow.pop %v2262
        %v2264 = vadd.f32 %v2263, 1.0
        %v2265 = vlog2.pop %v2264
        %v2266 = vmul.f32 %v2265, 0.6931472
        %v2267 = vadd.f32 %v2259, %v2266
        %v2268 = vsub.f32 0.0, %v2204
        %v2269 = vmax.f32 %v2268, 0.0
        %v2270 = vand.u32 2147483647, %v2268
        %v2271 = vsub.f32 0.0, %v2270
        %v2272 = vmul.f32 %v2271, 1.442695
        %v2273 = vpow.pop %v2272
        %v2274 = vadd.f32 %v2273, 1.0
        %v2275 = vlog2.pop %v2274
        %v2276 = vmul.f32 %v2275, 0.6931472
        %v2277 = vadd.f32 %v2269, %v2276
        %v2278 = vadd.f32 %v2267, %v2277
        %v2279 = vmul.f32 %v2278, 0.25
        %v2280 = vld [vmem:[%s906] sm:$0x1]
        %v2281 = vld [vmem:[%s21] sm:$0xf]
        %v2282 = vld [vmem:[%s21 + $0x4] sm:$0xf]
        %v2283 = vld [vmem:[%s21 + $0x8] sm:$0xf]
        %v2284 = vld [vmem:[%s21 + $0xc] sm:$0xf]
        %v2285 = vld [vmem:[%s22] sm:$0x1]
        %v2290 = vunpack.c.l.b16 %v2281
        %v2291 = vunpack.c.l.b16 %v2282
        %v2292 = vunpack.c.l.b16 %v2283
        %v2293 = vunpack.c.l.b16 %v2284
        %v2294 = vpack.c.b16 %v2291, %v2290
        %v2295 = vpack.c.b16 %v2293, %v2292
        %v2299 = vsel %vm1002, %v2280, 0
        %2301 = vmatpush.bf16.msra.mxu0 0
        %2302 = vmatpush.bf16.msra.mxu0 0
        %2303 = vmatpush.bf16.msra.mxu0 0
        %2304 = vmatpush.bf16.msra.mxu0 0
        %2305 = vmatpush.bf16.msra.mxu0 0
        %2306 = vmatpush.bf16.msra.mxu0 0
        %2307 = vmatpush.bf16.msra.mxu0 %v2295
        %2308 = vmatpush.bf16.msra.mxu0 %v2294
        %2309 = vmatmul.bf16.gmra.mxu0 %v2299
        %v2310 = vpop.f32.mrf.mxu0
        %v2311 = vadd.f32 %v2285, %v2310
        %v2312 = vpop.f32.mrf.mxu0
        %2313 = vdwg.mxu0
        %v2314 = vmax.f32 %v2311, 0.0
        %v2315 = vpack.c.bf16 %v2314, %v2314
        %v2316 = vld [vmem:[%s23] sm:$0xf]
        %v2317 = vld [vmem:[%s23 + $0x4] sm:$0xf]
        %v2318 = vld [vmem:[%s23 + $0x8] sm:$0xf]
        %v2319 = vld [vmem:[%s23 + $0xc] sm:$0xf]
        %v2320 = vld [vmem:[%s23 + $0x10] sm:$0xf]
        %v2321 = vld [vmem:[%s23 + $0x14] sm:$0xf]
        %v2322 = vld [vmem:[%s23 + $0x18] sm:$0xf]
        %v2323 = vld [vmem:[%s23 + $0x1c] sm:$0xf]
        %v2324 = vld [vmem:[%s23 + $0x20] sm:$0xf]
        %v2325 = vld [vmem:[%s23 + $0x24] sm:$0xf]
        %v2326 = vld [vmem:[%s23 + $0x28] sm:$0xf]
        %v2327 = vld [vmem:[%s23 + $0x2c] sm:$0xf]
        %v2328 = vld [vmem:[%s23 + $0x30] sm:$0xf]
        %v2329 = vld [vmem:[%s23 + $0x34] sm:$0xf]
        %v2330 = vld [vmem:[%s23 + $0x38] sm:$0xf]
        %v2331 = vld [vmem:[%s23 + $0x3c] sm:$0xf]
        %v2332 = vld [vmem:[%s24] sm:$0x1]
        %v2349 = vunpack.c.l.b16 %v2316
        %v2350 = vunpack.c.l.b16 %v2317
        %v2351 = vunpack.c.l.b16 %v2318
        %v2352 = vunpack.c.l.b16 %v2319
        %v2353 = vunpack.c.l.b16 %v2320
        %v2354 = vunpack.c.l.b16 %v2321
        %v2355 = vunpack.c.l.b16 %v2322
        %v2356 = vunpack.c.l.b16 %v2323
        %v2357 = vunpack.c.l.b16 %v2324
        %v2358 = vunpack.c.l.b16 %v2325
        %v2359 = vunpack.c.l.b16 %v2326
        %v2360 = vunpack.c.l.b16 %v2327
        %v2361 = vunpack.c.l.b16 %v2328
        %v2362 = vunpack.c.l.b16 %v2329
        %v2363 = vunpack.c.l.b16 %v2330
        %v2364 = vunpack.c.l.b16 %v2331
        %v2365 = vpack.c.b16 %v2350, %v2349
        %v2366 = vpack.c.b16 %v2352, %v2351
        %v2367 = vpack.c.b16 %v2354, %v2353
        %v2368 = vpack.c.b16 %v2356, %v2355
        %v2369 = vpack.c.b16 %v2358, %v2357
        %v2370 = vpack.c.b16 %v2360, %v2359
        %v2371 = vpack.c.b16 %v2362, %v2361
        %v2372 = vpack.c.b16 %v2364, %v2363
        %2381 = vmatpush.bf16.msra.mxu0 %v2372
        %2382 = vmatpush.bf16.msra.mxu0 %v2371
        %2383 = vmatpush.bf16.msra.mxu0 %v2370
        %2384 = vmatpush.bf16.msra.mxu0 %v2369
        %2385 = vmatpush.bf16.msra.mxu0 %v2368
        %2386 = vmatpush.bf16.msra.mxu0 %v2367
        %2387 = vmatpush.bf16.msra.mxu0 %v2366
        %2388 = vmatpush.bf16.msra.mxu0 %v2365
        %2389 = vmatmul.bf16.gmra.mxu0 %v2315
        %v2390 = vpop.f32.mrf.mxu0
        %v2391 = vadd.f32 %v2332, %v2390
        %v2392 = vpop.f32.mrf.mxu0
        %2393 = vdwg.mxu0
        %v2394 = vmax.f32 %v2391, 0.0
        %v2395 = vld [vmem:[%s25] sm:$0x1]
        %v2396 = vmul.f32 %v2394, %v2395
        %v2397 = vsel %vm2199, %v2396, 0.0
        %2398 = vadd.xlane.f32.xlu0 %v2397
        %v2399 = vpop.xlane.xlu0 %2398
        %v2400 = vld [vmem:[#allocation4] sm:$0x1]
        %v2401 = vadd.f32 %v2399, %v2400
        %2402 = vmatpush.bf16.msra.mxu0 0
        %2403 = vmatpush.bf16.msra.mxu0 0
        %2404 = vmatpush.bf16.msra.mxu0 0
        %2405 = vmatpush.bf16.msra.mxu0 0
        %2406 = vmatpush.bf16.msra.mxu0 0
        %2407 = vmatpush.bf16.msra.mxu0 0
        %2408 = vmatpush.bf16.msra.mxu0 %v2295
        %2409 = vmatpush.bf16.msra.mxu0 %v2294
        %2410 = vmatmul.bf16.gmra.mxu0 %v1940
        %v2411 = vpop.f32.mrf.mxu0
        %v2412 = vadd.f32 %v2285, %v2411
        %v2413 = vpop.f32.mrf.mxu0
        %2414 = vdwg.mxu0
        %v2415 = vmax.f32 %v2412, 0.0
        %v2416 = vpack.c.bf16 %v2415, %v2415
        %2417 = vmatpush.bf16.msra.mxu0 %v2372
        %2418 = vmatpush.bf16.msra.mxu0 %v2371
        %2419 = vmatpush.bf16.msra.mxu0 %v2370
        %2420 = vmatpush.bf16.msra.mxu0 %v2369
        %2421 = vmatpush.bf16.msra.mxu0 %v2368
        %2422 = vmatpush.bf16.msra.mxu0 %v2367
        %2423 = vmatpush.bf16.msra.mxu0 %v2366
        %2424 = vmatpush.bf16.msra.mxu0 %v2365
        %2425 = vmatmul.bf16.gmra.mxu0 %v2416
        %v2426 = vpop.f32.mrf.mxu0
        %v2427 = vadd.f32 %v2332, %v2426
        %v2428 = vpop.f32.mrf.mxu0
        %2429 = vdwg.mxu0
        %v2430 = vmax.f32 %v2427, 0.0
        %v2431 = vmul.f32 %v2430, %v2395
        %v2432 = vsel %vm2199, %v2431, 0.0
        %2433 = vadd.xlane.f32.xlu0 %v2432
        %v2434 = vpop.xlane.xlu0 %2433
        %v2435 = vadd.f32 %v2434, %v2400
        %v2436 = vsub.f32 0.0, %v2401
        %v2437 = vmax.f32 %v2436, 0.0
        %v2438 = vand.u32 2147483647, %v2436
        %v2439 = vsub.f32 0.0, %v2438
        %v2440 = vmul.f32 %v2439, 1.442695
        %v2441 = vpow.pop %v2440
        %v2442 = vadd.f32 %v2441, 1.0
        %v2443 = vlog2.pop %v2442
        %v2444 = vmul.f32 %v2443, 0.6931472
        %v2445 = vadd.f32 %v2437, %v2444
        %v2446 = vmax.f32 %v2435, 0.0
        %v2447 = vand.u32 2147483647, %v2435
        %v2448 = vsub.f32 0.0, %v2447
        %v2449 = vmul.f32 %v2448, 1.442695
        %v2450 = vpow.pop %v2449
        %v2451 = vadd.f32 %v2450, 1.0
        %v2452 = vlog2.pop %v2451
        %v2453 = vmul.f32 %v2452, 0.6931472
        %v2454 = vadd.f32 %v2446, %v2453
        %v2455 = vadd.f32 %v2445, %v2454
        %v2456 = vmul.f32 %v2455, 0.05
        %v2457 = vld [vmem:[#allocation5] sm:$0x1]
        %v2458 = vadd.f32 %v1920, %v2279
        %v2459 = vadd.f32 %v2458, %v2456
        %v2460 = vadd.f32 %v2457, %v2459
        %vm2461 = vcmask 0
        %2462 = vst.msk [vmem:[#allocation5] sm:$0x1] %vm2461, %v2460
        // Predicated region
        $region133: #{tpu_custom_call.1} parent=127 // pred_check
          %p2463 = pneg %p660
        $region134: #{tpu_custom_call.1} parent=127 // pred_check_branch
          %2465 = sbr.rel (%p2463) target = $region136
        $region135: #{tpu_custom_call.1} parent=127 // pred_region
          %2467 = vsyncadd [#allocation6], 0
          %s2469 = sshll.u32 [#allocation5], 4
          %s2470 = int_to_ptr.vmem [resolvable:$true] %s2469
          %s2471 = sshll.u32 %s27, 4
          %s2472 = int_to_ptr.hbm [resolvable:$true] %s2471
          %2474 = dma.vmem_to_hbm [thread:$0]  %s2470, 16, %s2472, [#allocation6]
        $region136: #{tpu_custom_call.1} parent=127 // pred_fallthru
          _
        // Predicated region
        $region137: #{tpu_custom_call.1} parent=127 // pred_check
          %p2475 = pneg %p660
        $region138: #{tpu_custom_call.1} parent=127 // pred_check_branch
          %2477 = sbr.rel (%p2475) target = $region140
        $region139: #{tpu_custom_call.1} parent=127 // pred_region
          %2479 = dma.done [#allocation6], 16
        $region140: #{tpu_custom_call.1} parent=127 // pred_fallthru
          _
      $region128: #{tpu_custom_call.1} parent=5 // pred_fallthru
        _
      %p2480 = scmp.le.s32.totalorder 2, %s40
      // Predicated region
      $region141: #{tpu_custom_call.1} parent=5 // pred_check
        %p2481 = pneg %p2480
      $region142: #{tpu_custom_call.1} parent=5 // pred_check_branch
        %2483 = sbr.rel (%p2481) target = $region144
      $region143: #{tpu_custom_call.1} parent=5 // pred_region
        %s2484 = ssub.s32 %s40, 2
      $region144: #{tpu_custom_call.1} parent=5 // pred_fallthru
        _
    $region6: #{tpu_custom_call.1} parent=1 // loop_footer
      %s44 = sadd.s32 1, %s40
    $region7: #{tpu_custom_call.1} parent=1 // loop_footer_branch
      %39 = sbr.rel target = $region3
    $region8: #{tpu_custom_call.1} parent=1 // loop_exit
      _
    %2485 = vsyncpa [#allocation6], 1
    %s2486 = scalar_lea.sflag [#allocation6], 1
    %2487 = vsyncpa %s2486, 1

</llo_original>
